<compile_context>
chip_gen: v7x
topology: tpu7x:2x2x1
jax: 0.10.0
libtpu: 0.0.40
codegen_flags: <defaults>
</compile_context>

<pallas_src>
import functools
import math

import jax
import jax.numpy as jnp
import numpy as np
from jax.experimental import pallas as pl
from jax.experimental.pallas import tpu as pltpu

EPS = 1e-6


def _round_up(x, m):
    return ((x + m - 1) // m) * m


def _dice_kernel(x_ref, t_ref, oi_ref, op_ref, ot_ref, *, S, TM, J, C):
    """One grid step over a (C, TM) channels-on-sublanes slab.

    x_ref:  (1, C, TM)   logits tile (f32/bf16, upcast to f32 in-kernel)
    t_ref:  (1, 1, TM)   integer class-index tile (int8/int16/int32)
    o*_ref: (1, 1, C, 1) resident per-chunk accumulators (intersect, sum p^2,
            sum t), accumulated across the "arbitrary" j axis and written back
            to HBM once per (n, p) chunk.
    """
    p_id = pl.program_id(1)
    j = pl.program_id(2)
    blk = p_id * J + j                         # logical spatial block id

    @pl.when(j == 0)
    def _init():
        oi_ref[...] = jnp.zeros_like(oi_ref)
        op_ref[...] = jnp.zeros_like(op_ref)
        ot_ref[...] = jnp.zeros_like(ot_ref)

    x = x_ref[0].astype(jnp.float32)           # (C, TM)
    t = t_ref[0].astype(jnp.int32)             # (1, TM)
    cls = jax.lax.broadcasted_iota(jnp.int32, (C, 1), 0)   # (C, 1)

    def _accumulate(prob, hot):
        # Cross-lane (XLU) reduces straight into the resident outputs;
        # elementwise work stays on the VPU, softmax divide on the EUP.
        oi_ref[...] += jnp.sum(jnp.where(hot, prob, 0.0), axis=-1,
                               keepdims=True).reshape(1, 1, C, 1)
        op_ref[...] += jnp.sum(prob * prob, axis=-1,
                               keepdims=True).reshape(1, 1, C, 1)
        ot_ref[...] += jnp.sum(jnp.where(hot, 1.0, 0.0), axis=-1,
                               keepdims=True).reshape(1, 1, C, 1)

    n_full = S // TM                           # fully-valid block count (static)

    @pl.when(blk < n_full)
    def _fast_path():                          # hot path: no masking at all
        m = jnp.max(x, axis=0, keepdims=True)
        e = jnp.exp(x - m)
        s = jnp.sum(e, axis=0, keepdims=True)
        prob = e * pl.reciprocal(s, approx=True)
        _accumulate(prob, cls == t)

    @pl.when(blk >= n_full)
    def _masked_path():                        # ragged tail / clamped re-fetch
        # rem stays in int32 range for any realistic 3D volume (<2^31 voxels).
        rem = S - blk * TM
        lane = jax.lax.broadcasted_iota(jnp.int32, (1, TM), 1)
        valid = lane < rem                     # all-False for clamped tail blocks
        xv = jnp.where(valid, x, 0.0)          # scrub stale lanes before exp
        m = jnp.max(xv, axis=0, keepdims=True)
        e = jnp.exp(xv - m)
        s = jnp.sum(e, axis=0, keepdims=True)
        prob = jnp.where(valid, e * pl.reciprocal(s, approx=True), 0.0)
        _accumulate(prob, (cls == t) & valid)


def _sublane_pad(rows, itemsize):
    """Sublane extent a (rows, lanes) VMEM block really occupies for a dtype."""
    packing = max(1, 4 // itemsize)            # sub-32-bit dtypes pack on sublanes
    return _round_up(max(rows, 1), 8 * packing)


def _pick_tile(s, c, x_itemsize, t_itemsize,
               budget_bytes=24 << 20, max_lanes=256 * 1024):
    """Lane tile: multiple of 128, sized so the *double-buffered* input working
    set (sublane-padded logits block + sublane-padded target block) stays
    within ~24 MiB — comfortably under a 48 MiB scoped-VMEM limit on v5e/v6e
    (128 MiB physical) and v7x (64 MiB per TensorCore)."""
    per_lane = 2 * (_sublane_pad(c, x_itemsize) * x_itemsize
                    + _sublane_pad(1, t_itemsize) * t_itemsize)
    cap = max(128, min(max_lanes, (budget_bytes // per_lane) // 128 * 128))
    # Keep blocks no wider than the 128-floored spatial extent so they stay
    # inside the array; the remainder is a masked ragged edge block.
    return min(cap, max(128, (s // 128) * 128))


@functools.partial(jax.jit, static_argnames=("tile_lanes",))
def dice_loss(logits, target, tile_lanes=None):
    """Equivalent of DiceLoss.forward(logits, target).

    logits: (N, C, *spatial) float (f32 or bf16 — upcast happens in-kernel)
    target: (N, *spatial)    integer class indices in [0, C)
    returns scalar float32 loss = 1 - mean_c(dice_c)
    """
    N, C = logits.shape[:2]
    S = math.prod(logits.shape[2:])

    # Free, contiguous reshapes: channels on sublanes, spatial on lanes.
    x = logits.reshape(N, C, S)
    tgt = target if target.dtype in (jnp.int8, jnp.int16, jnp.int32) \
        else target.astype(jnp.int32)
    t = tgt.reshape(N, 1, S)

    # Only sub-vreg volumes get padded (negligible); everything else relies on
    # the in-kernel validity mask for the ragged tail -> no extra HBM pass.
    s_data = S
    if S < 128:
        x = jnp.pad(x, ((0, 0), (0, 0), (0, 128 - S)))
        t = jnp.pad(t, ((0, 0), (0, 0), (0, 128 - S)))
        s_data = 128

    if tile_lanes is None:
        tm = _pick_tile(s_data, C, x.dtype.itemsize, t.dtype.itemsize)
    else:
        tm = min(max(128, (int(tile_lanes) // 128) * 128),
                 max(128, (s_data // 128) * 128))

    n_blk = pl.cdiv(s_data, tm)                # spatial blocks per sample
    # Batch axis already feeds the parallel grid; only split the spatial axis
    # when N == 1 so a 2-TensorCore chip (v7x) still gets two parallel chunks.
    n_par = 1 if N >= 2 else min(n_blk, 2)
    J = pl.cdiv(n_blk, n_par)                  # sequential accumulation steps

    def data_index(n, p, j):
        # (p, j) steps past n_blk re-fetch the last block; the kernel masks
        # their contribution to zero.
        return (n, 0, jnp.minimum(p * J + j, n_blk - 1))

    out_spec = pl.BlockSpec((1, 1, C, 1), lambda n, p, j: (n, p, 0, 0))
    out_sds = jax.ShapeDtypeStruct((N, n_par, C, 1), jnp.float32)

    kernel = functools.partial(_dice_kernel, S=S, TM=tm, J=J, C=C)

    out_i, out_p2, out_t2 = pl.pallas_call(
        kernel,
        out_shape=(out_sds, out_sds, out_sds),
        grid_spec=pltpu.PrefetchScalarGridSpec(
            num_scalar_prefetch=0,
            grid=(N, n_par, J),
            in_specs=[
                pl.BlockSpec((1, C, tm), data_index),
                pl.BlockSpec((1, 1, tm), data_index),
            ],
            out_specs=[out_spec, out_spec, out_spec],
        ),
        compiler_params=pltpu.CompilerParams(
            dimension_semantics=("parallel", "parallel", "arbitrary"),
            vmem_limit_bytes=48 * 1024 * 1024,
        ),
    )(x, t)

    # Tiny final combine (N * n_par * C * 3 floats) in plain XLA.
    intersect = jnp.sum(out_i, axis=(0, 1, 3))             # (C,)
    p2 = jnp.sum(out_p2, axis=(0, 1, 3))
    t2 = jnp.sum(out_t2, axis=(0, 1, 3))
    dice = 2.0 * intersect / jnp.maximum(p2 + t2, EPS)
    return 1.0 - jnp.mean(dice)


def _dice_loss_ref(logits, target):
    """Pure-JAX reference mirroring the PyTorch DiceLoss.forward."""
    C = logits.shape[1]
    p = jax.nn.softmax(logits.astype(jnp.float32), axis=1)     # (N,C,*sp)
    oh = jax.nn.one_hot(target, C, dtype=jnp.float32)          # (N,*sp,C)
    oh = jnp.moveaxis(oh, -1, 1)                                # (N,C,*sp)
    pf = jnp.moveaxis(p, 1, 0).reshape(C, -1)
    tf = jnp.moveaxis(oh, 1, 0).reshape(C, -1)
    intersect = jnp.sum(pf * tf, axis=-1)
    denom = jnp.maximum(jnp.sum(pf * pf, -1) + jnp.sum(tf * tf, -1), EPS)
    return 1.0 - jnp.mean(2.0 * intersect / denom)


if __name__ == "__main__":
    root = jax.random.PRNGKey(0)

    def run_case(idx, N, C, D, H, W, tile_lanes=None,
                 logit_dtype=jnp.float32, target_dtype=jnp.int32):
        k1, k2 = jax.random.split(jax.random.fold_in(root, idx))
        logits = jax.random.normal(k1, (N, C, D, H, W)).astype(logit_dtype)
        target = jax.random.randint(k2, (N, D, H, W), 0, C,
                                    dtype=jnp.int32).astype(target_dtype)
        got = jax.block_until_ready(dice_loss(logits, target,
                                              tile_lanes=tile_lanes))
        ref = jax.block_until_ready(
            _dice_loss_ref(logits, target.astype(jnp.int32)))
        np.testing.assert_allclose(np.asarray(got), np.asarray(ref),
                                   rtol=1e-3, atol=1e-3)

    # single fully-valid block per sample (fast path only)
    run_case(0, N=2, C=4, D=16, H=16, W=16)
    # ragged spatial extent, N == 1 -> 2 parallel chunks + masked edge block
    run_case(1, N=1, C=3, D=7, H=9, W=11)
    # multi-block accumulation along the arbitrary axis + 128-aligned ragged tail
    run_case(2, N=2, C=4, D=16, H=16, W=16, tile_lanes=384)
    # clamped-tail re-fetch (n_par=2, odd block count), bf16 logits, int8 target
    run_case(3, N=1, C=5, D=5, H=8, W=9, tile_lanes=128,
             logit_dtype=jnp.bfloat16, target_dtype=jnp.int8)

    print("KERNEL_OK")
</pallas_src>

<mosaic_0001>
module attributes {stable_mosaic.version = 11 : i64} {
  func.func @_dice_kernel(%arg0: i32, %arg1: i32, %arg2: i32, %arg3: memref<1x4x4096xf32, #tpu.memory_space<vmem>>, %arg4: memref<1x1x4096xi32, #tpu.memory_space<vmem>>, %arg5: memref<1x1x4x1xf32, #tpu.memory_space<vmem>>, %arg6: memref<1x1x4x1xf32, #tpu.memory_space<vmem>>, %arg7: memref<1x1x4x1xf32, #tpu.memory_space<vmem>>) attributes {dimension_semantics = [#tpu.dimension_semantics<parallel>, #tpu.dimension_semantics<parallel>, #tpu.dimension_semantics<arbitrary>], iteration_bounds = array<i64: 2, 1, 1>, scalar_prefetch = 0 : i64, scratch_operands = 0 : i64, tpu.core_type = #tpu.core_type<tc>, window_params = [{transform_indices = @transform_0, window_bounds = array<i64: 1, 4, 4096>}, {transform_indices = @transform_1, window_bounds = array<i64: 1, 1, 4096>}, {transform_indices = @transform_2, window_bounds = array<i64: 1, 1, 4, 1>}, {transform_indices = @transform_3, window_bounds = array<i64: 1, 1, 4, 1>}, {transform_indices = @transform_4, window_bounds = array<i64: 1, 1, 4, 1>}]} {
    %c1_i32 = arith.constant 1 : i32
    %0 = arith.muli %arg1, %c1_i32 : i32
    %1 = arith.addi %0, %arg2 : i32
    %c0_i32 = arith.constant 0 : i32
    %2 = arith.cmpi eq, %arg2, %c0_i32 : i32
    %3 = arith.extui %2 : i1 to i32
    %c0_i32_0 = arith.constant 0 : i32
    %4 = arith.cmpi ne, %3, %c0_i32_0 : i32
    scf.if %4 {
      %cst = arith.constant 0.000000e+00 : f32
      %16 = vector.broadcast %cst : f32 to vector<1x1x4x1xf32>
      %c0_10 = arith.constant 0 : index
      %c0_11 = arith.constant 0 : index
      %c0_12 = arith.constant 0 : index
      %c0_13 = arith.constant 0 : index
      %17 = vector.load %arg5[%c0_10, %c0_11, %c0_12, %c0_13] : memref<1x1x4x1xf32, #tpu.memory_space<vmem>>, vector<1x1x4x1xf32>
      tpu.vector_store %arg5[%c0_10, %c0_11, %c0_12, %c0_13], %16 {strides = array<i32>} : memref<1x1x4x1xf32, #tpu.memory_space<vmem>>, vector<1x1x4x1xf32>,
      %cst_14 = arith.constant 0.000000e+00 : f32
      %18 = vector.broadcast %cst_14 : f32 to vector<1x1x4x1xf32>
      %c0_15 = arith.constant 0 : index
      %c0_16 = arith.constant 0 : index
      %c0_17 = arith.constant 0 : index
      %c0_18 = arith.constant 0 : index
      %19 = vector.load %arg6[%c0_15, %c0_16, %c0_17, %c0_18] : memref<1x1x4x1xf32, #tpu.memory_space<vmem>>, vector<1x1x4x1xf32>
      tpu.vector_store %arg6[%c0_15, %c0_16, %c0_17, %c0_18], %18 {strides = array<i32>} : memref<1x1x4x1xf32, #tpu.memory_space<vmem>>, vector<1x1x4x1xf32>,
      %cst_19 = arith.constant 0.000000e+00 : f32
      %20 = vector.broadcast %cst_19 : f32 to vector<1x1x4x1xf32>
      %c0_20 = arith.constant 0 : index
      %c0_21 = arith.constant 0 : index
      %c0_22 = arith.constant 0 : index
      %c0_23 = arith.constant 0 : index
      %21 = vector.load %arg7[%c0_20, %c0_21, %c0_22, %c0_23] : memref<1x1x4x1xf32, #tpu.memory_space<vmem>>, vector<1x1x4x1xf32>
      tpu.vector_store %arg7[%c0_20, %c0_21, %c0_22, %c0_23], %20 {strides = array<i32>} : memref<1x1x4x1xf32, #tpu.memory_space<vmem>>, vector<1x1x4x1xf32>,
    } else {
    }
    %c0 = arith.constant 0 : index
    %c0_1 = arith.constant 0 : index
    %c0_2 = arith.constant 0 : index
    %5 = vector.load %arg3[%c0, %c0_1, %c0_2] : memref<1x4x4096xf32, #tpu.memory_space<vmem>>, vector<1x4x4096xf32>
    %6 = vector.shape_cast %5 : vector<1x4x4096xf32> to vector<4x4096xf32>
    %c0_3 = arith.constant 0 : index
    %c0_4 = arith.constant 0 : index
    %c0_5 = arith.constant 0 : index
    %7 = vector.load %arg4[%c0_3, %c0_4, %c0_5] : memref<1x1x4096xi32, #tpu.memory_space<vmem>>, vector<1x1x4096xi32>
    %8 = vector.shape_cast %7 : vector<1x1x4096xi32> to vector<1x4096xi32>
    %9 = tpu.iota {dimensions = array<i32: 0>} : vector<4x1xi32>
    %c1_i32_6 = arith.constant 1 : i32
    %10 = arith.cmpi slt, %1, %c1_i32_6 : i32
    %11 = arith.extui %10 : i1 to i32
    %c0_i32_7 = arith.constant 0 : i32
    %12 = arith.cmpi ne, %11, %c0_i32_7 : i32
    scf.if %12 {
      %cst = arith.constant dense<0xFF800000> : vector<4096xf32>
      %16 = vector.multi_reduction <maximumf>, %6, %cst [0] : vector<4x4096xf32> to vector<4096xf32>
      %17 = vector.shape_cast %16 : vector<4096xf32> to vector<1x4096xf32>
      %18 = vector.broadcast %17 : vector<1x4096xf32> to vector<4x4096xf32>
      %19 = arith.subf %6, %18 : vector<4x4096xf32>
      %20 = math.exp %19 : vector<4x4096xf32>
      %cst_10 = arith.constant dense<0.000000e+00> : vector<4096xf32>
      %21 = vector.multi_reduction <add>, %20, %cst_10 [0] : vector<4x4096xf32> to vector<4096xf32>
      %22 = vector.shape_cast %21 : vector<4096xf32> to vector<1x4096xf32>
      %23 = tpu.reciprocal %22 {approx = true} : vector<1x4096xf32> -> vector<1x4096xf32>
      %24 = vector.broadcast %23 : vector<1x4096xf32> to vector<4x4096xf32>
      %25 = arith.mulf %20, %24 : vector<4x4096xf32>
      %26 = vector.broadcast %9 : vector<4x1xi32> to vector<4x4096xi32>
      %27 = vector.broadcast %8 : vector<1x4096xi32> to vector<4x4096xi32>
      %28 = arith.cmpi eq, %26, %27 : vector<4x4096xi32>
      %c0_11 = arith.constant 0 : index
      %c0_12 = arith.constant 0 : index
      %c0_13 = arith.constant 0 : index
      %c0_14 = arith.constant 0 : index
      %29 = vector.load %arg5[%c0_11, %c0_12, %c0_13, %c0_14] : memref<1x1x4x1xf32, #tpu.memory_space<vmem>>, vector<1x1x4x1xf32>
      %cst_15 = arith.constant 0.000000e+00 : f32
      %30 = vector.broadcast %cst_15 : f32 to vector<4x4096xf32>
      %31 = arith.select %28, %25, %30 : vector<4x4096xi1>, vector<4x4096xf32>
      %cst_16 = arith.constant dense<0.000000e+00> : vector<4xf32>
      %32 = vector.multi_reduction <add>, %31, %cst_16 [1] : vector<4x4096xf32> to vector<4xf32>
      %33 = vector.shape_cast %32 : vector<4xf32> to vector<4x1xf32>
      %34 = vector.shape_cast %33 : vector<4x1xf32> to vector<1x1x4x1xf32>
      %35 = arith.addf %29, %34 : vector<1x1x4x1xf32>
      %c0_17 = arith.constant 0 : index
      %c0_18 = arith.constant 0 : index
      %c0_19 = arith.constant 0 : index
      %c0_20 = arith.constant 0 : index
      %36 = vector.load %arg5[%c0_17, %c0_18, %c0_19, %c0_20] : memref<1x1x4x1xf32, #tpu.memory_space<vmem>>, vector<1x1x4x1xf32>
      tpu.vector_store %arg5[%c0_17, %c0_18, %c0_19, %c0_20], %35 {strides = array<i32>} : memref<1x1x4x1xf32, #tpu.memory_space<vmem>>, vector<1x1x4x1xf32>,
      %c0_21 = arith.constant 0 : index
      %c0_22 = arith.constant 0 : index
      %c0_23 = arith.constant 0 : index
      %c0_24 = arith.constant 0 : index
      %37 = vector.load %arg6[%c0_21, %c0_22, %c0_23, %c0_24] : memref<1x1x4x1xf32, #tpu.memory_space<vmem>>, vector<1x1x4x1xf32>
      %38 = arith.mulf %25, %25 : vector<4x4096xf32>
      %cst_25 = arith.constant dense<0.000000e+00> : vector<4xf32>
      %39 = vector.multi_reduction <add>, %38, %cst_25 [1] : vector<4x4096xf32> to vector<4xf32>
      %40 = vector.shape_cast %39 : vector<4xf32> to vector<4x1xf32>
      %41 = vector.shape_cast %40 : vector<4x1xf32> to vector<1x1x4x1xf32>
      %42 = arith.addf %37, %41 : vector<1x1x4x1xf32>
      %c0_26 = arith.constant 0 : index
      %c0_27 = arith.constant 0 : index
      %c0_28 = arith.constant 0 : index
      %c0_29 = arith.constant 0 : index
      %43 = vector.load %arg6[%c0_26, %c0_27, %c0_28, %c0_29] : memref<1x1x4x1xf32, #tpu.memory_space<vmem>>, vector<1x1x4x1xf32>
      tpu.vector_store %arg6[%c0_26, %c0_27, %c0_28, %c0_29], %42 {strides = array<i32>} : memref<1x1x4x1xf32, #tpu.memory_space<vmem>>, vector<1x1x4x1xf32>,
      %c0_30 = arith.constant 0 : index
      %c0_31 = arith.constant 0 : index
      %c0_32 = arith.constant 0 : index
      %c0_33 = arith.constant 0 : index
      %44 = vector.load %arg7[%c0_30, %c0_31, %c0_32, %c0_33] : memref<1x1x4x1xf32, #tpu.memory_space<vmem>>, vector<1x1x4x1xf32>
      %cst_34 = arith.constant 1.000000e+00 : f32
      %cst_35 = arith.constant 0.000000e+00 : f32
      %45 = vector.broadcast %cst_34 : f32 to vector<4x4096xf32>
      %46 = vector.broadcast %cst_35 : f32 to vector<4x4096xf32>
      %47 = arith.select %28, %45, %46 : vector<4x4096xi1>, vector<4x4096xf32>
      %cst_36 = arith.constant dense<0.000000e+00> : vector<4xf32>
      %48 = vector.multi_reduction <add>, %47, %cst_36 [1] : vector<4x4096xf32> to vector<4xf32>
      %49 = vector.shape_cast %48 : vector<4xf32> to vector<4x1xf32>
      %50 = vector.shape_cast %49 : vector<4x1xf32> to vector<1x1x4x1xf32>
      %51 = arith.addf %44, %50 : vector<1x1x4x1xf32>
      %c0_37 = arith.constant 0 : index
      %c0_38 = arith.constant 0 : index
      %c0_39 = arith.constant 0 : index
      %c0_40 = arith.constant 0 : index
      %52 = vector.load %arg7[%c0_37, %c0_38, %c0_39, %c0_40] : memref<1x1x4x1xf32, #tpu.memory_space<vmem>>, vector<1x1x4x1xf32>
      tpu.vector_store %arg7[%c0_37, %c0_38, %c0_39, %c0_40], %51 {strides = array<i32>} : memref<1x1x4x1xf32, #tpu.memory_space<vmem>>, vector<1x1x4x1xf32>,
    } else {
    }
    %c1_i32_8 = arith.constant 1 : i32
    %13 = arith.cmpi sge, %1, %c1_i32_8 : i32
    %14 = arith.extui %13 : i1 to i32
    %c0_i32_9 = arith.constant 0 : i32
    %15 = arith.cmpi ne, %14, %c0_i32_9 : i32
    scf.if %15 {
      %c4096_i32 = arith.constant 4096 : i32
      %16 = arith.muli %1, %c4096_i32 : i32
      %c4096_i32_10 = arith.constant 4096 : i32
      %17 = arith.subi %c4096_i32_10, %16 : i32
      %18 = tpu.iota {dimensions = array<i32: 1>} : vector<1x4096xi32>
      %19 = vector.broadcast %17 : i32 to vector<1x4096xi32>
      %20 = arith.cmpi slt, %18, %19 : vector<1x4096xi32>
      %cst = arith.constant 0.000000e+00 : f32
      %21 = vector.shape_cast %20 : vector<1x4096xi1> to vector<1x4096xi1>
      %22 = vector.broadcast %21 : vector<1x4096xi1> to vector<4x4096xi1>
      %23 = vector.broadcast %cst : f32 to vector<4x4096xf32>
      %24 = arith.select %22, %6, %23 : vector<4x4096xi1>, vector<4x4096xf32>
      %cst_11 = arith.constant dense<0xFF800000> : vector<4096xf32>
      %25 = vector.multi_reduction <maximumf>, %24, %cst_11 [0] : vector<4x4096xf32> to vector<4096xf32>
      %26 = vector.shape_cast %25 : vector<4096xf32> to vector<1x4096xf32>
      %27 = vector.broadcast %26 : vector<1x4096xf32> to vector<4x4096xf32>
      %28 = arith.subf %24, %27 : vector<4x4096xf32>
      %29 = math.exp %28 : vector<4x4096xf32>
      %cst_12 = arith.constant dense<0.000000e+00> : vector<4096xf32>
      %30 = vector.multi_reduction <add>, %29, %cst_12 [0] : vector<4x4096xf32> to vector<4096xf32>
      %31 = vector.shape_cast %30 : vector<4096xf32> to vector<1x4096xf32>
      %32 = tpu.reciprocal %31 {approx = true} : vector<1x4096xf32> -> vector<1x4096xf32>
      %33 = vector.broadcast %32 : vector<1x4096xf32> to vector<4x4096xf32>
      %34 = arith.mulf %29, %33 : vector<4x4096xf32>
      %cst_13 = arith.constant 0.000000e+00 : f32
      %35 = vector.shape_cast %20 : vector<1x4096xi1> to vector<1x4096xi1>
      %36 = vector.broadcast %35 : vector<1x4096xi1> to vector<4x4096xi1>
      %37 = vector.broadcast %cst_13 : f32 to vector<4x4096xf32>
      %38 = arith.select %36, %34, %37 : vector<4x4096xi1>, vector<4x4096xf32>
      %39 = vector.broadcast %9 : vector<4x1xi32> to vector<4x4096xi32>
      %40 = vector.broadcast %8 : vector<1x4096xi32> to vector<4x4096xi32>
      %41 = arith.cmpi eq, %39, %40 : vector<4x4096xi32>
      %42 = vector.broadcast %20 : vector<1x4096xi1> to vector<4x4096xi1>
      %43 = arith.andi %41, %42 : vector<4x4096xi1>
      %c0_14 = arith.constant 0 : index
      %c0_15 = arith.constant 0 : index
      %c0_16 = arith.constant 0 : index
      %c0_17 = arith.constant 0 : index
      %44 = vector.load %arg5[%c0_14, %c0_15, %c0_16, %c0_17] : memref<1x1x4x1xf32, #tpu.memory_space<vmem>>, vector<1x1x4x1xf32>
      %cst_18 = arith.constant 0.000000e+00 : f32
      %45 = vector.broadcast %cst_18 : f32 to vector<4x4096xf32>
      %46 = arith.select %43, %38, %45 : vector<4x4096xi1>, vector<4x4096xf32>
      %cst_19 = arith.constant dense<0.000000e+00> : vector<4xf32>
      %47 = vector.multi_reduction <add>, %46, %cst_19 [1] : vector<4x4096xf32> to vector<4xf32>
      %48 = vector.shape_cast %47 : vector<4xf32> to vector<4x1xf32>
      %49 = vector.shape_cast %48 : vector<4x1xf32> to vector<1x1x4x1xf32>
      %50 = arith.addf %44, %49 : vector<1x1x4x1xf32>
      %c0_20 = arith.constant 0 : index
      %c0_21 = arith.constant 0 : index
      %c0_22 = arith.constant 0 : index
      %c0_23 = arith.constant 0 : index
      %51 = vector.load %arg5[%c0_20, %c0_21, %c0_22, %c0_23] : memref<1x1x4x1xf32, #tpu.memory_space<vmem>>, vector<1x1x4x1xf32>
      tpu.vector_store %arg5[%c0_20, %c0_21, %c0_22, %c0_23], %50 {strides = array<i32>} : memref<1x1x4x1xf32, #tpu.memory_space<vmem>>, vector<1x1x4x1xf32>,
      %c0_24 = arith.constant 0 : index
      %c0_25 = arith.constant 0 : index
      %c0_26 = arith.constant 0 : index
      %c0_27 = arith.constant 0 : index
      %52 = vector.load %arg6[%c0_24, %c0_25, %c0_26, %c0_27] : memref<1x1x4x1xf32, #tpu.memory_space<vmem>>, vector<1x1x4x1xf32>
      %53 = arith.mulf %38, %38 : vector<4x4096xf32>
      %cst_28 = arith.constant dense<0.000000e+00> : vector<4xf32>
      %54 = vector.multi_reduction <add>, %53, %cst_28 [1] : vector<4x4096xf32> to vector<4xf32>
      %55 = vector.shape_cast %54 : vector<4xf32> to vector<4x1xf32>
      %56 = vector.shape_cast %55 : vector<4x1xf32> to vector<1x1x4x1xf32>
      %57 = arith.addf %52, %56 : vector<1x1x4x1xf32>
      %c0_29 = arith.constant 0 : index
      %c0_30 = arith.constant 0 : index
      %c0_31 = arith.constant 0 : index
      %c0_32 = arith.constant 0 : index
      %58 = vector.load %arg6[%c0_29, %c0_30, %c0_31, %c0_32] : memref<1x1x4x1xf32, #tpu.memory_space<vmem>>, vector<1x1x4x1xf32>
      tpu.vector_store %arg6[%c0_29, %c0_30, %c0_31, %c0_32], %57 {strides = array<i32>} : memref<1x1x4x1xf32, #tpu.memory_space<vmem>>, vector<1x1x4x1xf32>,
      %c0_33 = arith.constant 0 : index
      %c0_34 = arith.constant 0 : index
      %c0_35 = arith.constant 0 : index
      %c0_36 = arith.constant 0 : index
      %59 = vector.load %arg7[%c0_33, %c0_34, %c0_35, %c0_36] : memref<1x1x4x1xf32, #tpu.memory_space<vmem>>, vector<1x1x4x1xf32>
      %cst_37 = arith.constant 1.000000e+00 : f32
      %cst_38 = arith.constant 0.000000e+00 : f32
      %60 = vector.broadcast %cst_37 : f32 to vector<4x4096xf32>
      %61 = vector.broadcast %cst_38 : f32 to vector<4x4096xf32>
      %62 = arith.select %43, %60, %61 : vector<4x4096xi1>, vector<4x4096xf32>
      %cst_39 = arith.constant dense<0.000000e+00> : vector<4xf32>
      %63 = vector.multi_reduction <add>, %62, %cst_39 [1] : vector<4x4096xf32> to vector<4xf32>
      %64 = vector.shape_cast %63 : vector<4xf32> to vector<4x1xf32>
      %65 = vector.shape_cast %64 : vector<4x1xf32> to vector<1x1x4x1xf32>
      %66 = arith.addf %59, %65 : vector<1x1x4x1xf32>
      %c0_40 = arith.constant 0 : index
      %c0_41 = arith.constant 0 : index
      %c0_42 = arith.constant 0 : index
      %c0_43 = arith.constant 0 : index
      %67 = vector.load %arg7[%c0_40, %c0_41, %c0_42, %c0_43] : memref<1x1x4x1xf32, #tpu.memory_space<vmem>>, vector<1x1x4x1xf32>
      tpu.vector_store %arg7[%c0_40, %c0_41, %c0_42, %c0_43], %66 {strides = array<i32>} : memref<1x1x4x1xf32, #tpu.memory_space<vmem>>, vector<1x1x4x1xf32>,
    } else {
    }
    return
  }
  func.func @transform_0(%arg0: i32, %arg1: i32, %arg2: i32) -> (i32, i32, i32) {
    %c1_i32 = arith.constant 1 : i32
    %0 = arith.muli %arg1, %c1_i32 : i32
    %1 = arith.addi %0, %arg2 : i32
    %c0_i32 = arith.constant 0 : i32
    %2 = arith.minsi %1, %c0_i32 : i32
    %c0_i32_0 = arith.constant 0 : i32
    %c0_i32_1 = arith.constant 0 : i32
    return %arg0, %c0_i32_0, %2 : i32, i32, i32
  }
  func.func @transform_1(%arg0: i32, %arg1: i32, %arg2: i32) -> (i32, i32, i32) {
    %c1_i32 = arith.constant 1 : i32
    %0 = arith.muli %arg1, %c1_i32 : i32
    %1 = arith.addi %0, %arg2 : i32
    %c0_i32 = arith.constant 0 : i32
    %2 = arith.minsi %1, %c0_i32 : i32
    %c0_i32_0 = arith.constant 0 : i32
    %c0_i32_1 = arith.constant 0 : i32
    return %arg0, %c0_i32_0, %2 : i32, i32, i32
  }
  func.func @transform_2(%arg0: i32, %arg1: i32, %arg2: i32) -> (i32, i32, i32, i32) {
    %c0_i32 = arith.constant 0 : i32
    %c0_i32_0 = arith.constant 0 : i32
    %c0_i32_1 = arith.constant 0 : i32
    return %arg0, %arg1, %c0_i32, %c0_i32_0 : i32, i32, i32, i32
  }
  func.func @transform_3(%arg0: i32, %arg1: i32, %arg2: i32) -> (i32, i32, i32, i32) {
    %c0_i32 = arith.constant 0 : i32
    %c0_i32_0 = arith.constant 0 : i32
    %c0_i32_1 = arith.constant 0 : i32
    return %arg0, %arg1, %c0_i32, %c0_i32_0 : i32, i32, i32, i32
  }
  func.func @transform_4(%arg0: i32, %arg1: i32, %arg2: i32) -> (i32, i32, i32, i32) {
    %c0_i32 = arith.constant 0 : i32
    %c0_i32_0 = arith.constant 0 : i32
    %c0_i32_1 = arith.constant 0 : i32
    return %arg0, %arg1, %c0_i32, %c0_i32_0 : i32, i32, i32, i32
  }
}

</mosaic_0001>

<llo_original>
// kernel: dice_loss.1
$region0: #{dice_loss.1}
  #allocation0 [shape = 'u32[]', space=smem, size = 0x4, offset = 0x4, fixed_abs, tag = 'smem constant byte address 0x4 - core index']
  #allocation1 [shape = 'u32[144,128]{1,0:T(1,128)}', space=vmem, size = 0x12000, scoped, tag = 'internal scratch']
  %s0 = inlined_call_operand.vmem [shape: f32[2,4,4096], index: 0, kind: input, shape index: {}]
  %s1 = inlined_call_operand.vmem [shape: s32[2,1,4096], index: 1, kind: input, shape index: {}]
  %s2 = inlined_call_operand.vmem [shape: f32[2,1,4,1], index: 2, kind: output, shape index: {0}]
  %s3 = inlined_call_operand.vmem [shape: f32[2,1,4,1], index: 3, kind: output, shape index: {1}]
  %s4 = inlined_call_operand.vmem [shape: f32[2,1,4,1], index: 4, kind: output, shape index: {2}]
  %5 = xla_tuple %s2, %s3, %s4
  %s6 = sld [smem:[#allocation0]]
  $region69: #{dice_loss.1} parent=0
    _
  %s8 = ssub.s32 1, %s6
  %s9 = scalar_select 0, %s8, %s6
  loop: start=0, step=1, limit=4
  $region2: #{dice_loss.1} parent=0 // loop_pre_header
    _
  $region3: #{dice_loss.1} parent=0 // loop_header
    %s11 = sphi 0, %s15
    %p12 = scmp.ge.s32.totalorder %s11, 4
    %s18 = sphi 0, %s37
    %s19 = sphi 0, %s33
    %s20 = sphi 0, %s29
    %s21 = sphi 0, %s18
    %s22 = sphi 0, %s19
    %s23 = sphi 0, %s20
    %s24 = sphi 0, %s21
    %s25 = sphi 0, %s22
    %s26 = sphi 0, %s23
    %s48 = sphi 0, %s50
    %s51 = sphi 0, %s48
    %s52 = sphi 0, %s51
    %s68 = sphi 0, %s52
    %s82 = sphi 0, %s84
    %s85 = sphi 0, %s82
    %s86 = sphi 0, %s85
    %s102 = sphi 0, %s86
    %s110 = sphi 0, %s112
    %s113 = sphi 0, %s110
    %s114 = sphi 0, %s113
    %s130 = sphi 0, %s114
    %s138 = sphi 0, %s140
    %s141 = sphi 0, %s138
    %s142 = sphi 0, %s141
    %s158 = sphi 0, %s142
    %s166 = sphi 0, %s168
    %s169 = sphi 0, %s166
    %s170 = sphi 0, %s169
    %s186 = sphi 0, %s170
  $region4: #{dice_loss.1} parent=0 // loop_header_branch
    %14 = sbr.rel (%p12) target = $region8
  $region5: #{dice_loss.1} parent=0 // loop_body
    %s16 = ssub.s32 %s11, 1
    %s17 = ssub.s32 %s11, 2
    %s27 = sadd.s32 1, %s20
    %p28 = scmp.ge.s32.totalorder %s27, 1
    %s29 = scalar_select %p28, 0, %s27
    %s30 = sadd.s32 1, %s19
    %s31 = scalar_select %p28, %s30, %s19
    %p32 = scmp.ge.s32.totalorder %s31, 1
    %s33 = scalar_select %p32, 0, %s31
    %s34 = sadd.s32 1, %s18
    %s35 = scalar_select %p32, %s34, %s18
    %p36 = scmp.ge.s32.totalorder %s35, 2
    %s37 = scalar_select %p36, 0, %s35
    %s38 = sadd.s32 %s19, %s20
    %p39 = scmp.lt.s32.totalorder %s38, 0
    %s40 = scalar_select %p39, %s38, 0
    %s41 = sadd.s32 %s33, %s29
    %p42 = scmp.lt.s32.totalorder %s41, 0
    %s43 = scalar_select %p42, %s41, 0
    %s44 = ssub.s32 %s18, %s37
    %s45 = ssub.s32 %s40, %s43
    %s46 = sor.u32 %s44, %s45
    %p47 = scmp.eq.s32.totalorder %s46, 0
    %s49 = sadd.s32 %s48, 1
    %s50 = scalar_select %p47, %s48, %s49
    %p53 = pneg %p47
    %p54 = scmp.eq.s32.totalorder %s11, 1
    %p55 = por %p53, %p54
    %p56 = scmp.ne.s32.totalorder %s48, %s51
    %p57 = scmp.eq.s32.totalorder %s11, 0
    %p58 = por %p56, %p57
    %p59 = scmp.ne.s32.totalorder %s48, %s51
    %p60 = scmp.eq.s32.totalorder %s16, 1
    %p61 = por %p59, %p60
    %p62 = scmp.ne.s32.totalorder %s51, %s52
    %p63 = scmp.eq.s32.totalorder %s16, 0
    %p64 = por %p62, %p63
    %p65 = scmp.ne.s32.totalorder %s51, %s52
    %p66 = scmp.eq.s32.totalorder %s17, 1
    %p67 = por %p65, %p66
    %p69 = scmp.ne.s32.totalorder %s52, %s68
    %p70 = scmp.eq.s32.totalorder %s17, 0
    %p71 = por %p69, %p70
    %s72 = sadd.s32 %s19, %s20
    %p73 = scmp.lt.s32.totalorder %s72, 0
    %s74 = scalar_select %p73, %s72, 0
    %s75 = sadd.s32 %s33, %s29
    %p76 = scmp.lt.s32.totalorder %s75, 0
    %s77 = scalar_select %p76, %s75, 0
    %s78 = ssub.s32 %s18, %s37
    %s79 = ssub.s32 %s74, %s77
    %s80 = sor.u32 %s78, %s79
    %p81 = scmp.eq.s32.totalorder %s80, 0
    %s83 = sadd.s32 %s82, 1
    %s84 = scalar_select %p81, %s82, %s83
    %p87 = pneg %p81
    %p88 = scmp.eq.s32.totalorder %s11, 1
    %p89 = por %p87, %p88
    %p90 = scmp.ne.s32.totalorder %s82, %s85
    %p91 = scmp.eq.s32.totalorder %s11, 0
    %p92 = por %p90, %p91
    %p93 = scmp.ne.s32.totalorder %s82, %s85
    %p94 = scmp.eq.s32.totalorder %s16, 1
    %p95 = por %p93, %p94
    %p96 = scmp.ne.s32.totalorder %s85, %s86
    %p97 = scmp.eq.s32.totalorder %s16, 0
    %p98 = por %p96, %p97
    %p99 = scmp.ne.s32.totalorder %s85, %s86
    %p100 = scmp.eq.s32.totalorder %s17, 1
    %p101 = por %p99, %p100
    %p103 = scmp.ne.s32.totalorder %s86, %s102
    %p104 = scmp.eq.s32.totalorder %s17, 0
    %p105 = por %p103, %p104
    %s106 = ssub.s32 %s18, %s37
    %s107 = ssub.s32 %s19, %s33
    %s108 = sor.u32 %s106, %s107
    %p109 = scmp.eq.s32.totalorder %s108, 0
    %s111 = sadd.s32 %s110, 1
    %s112 = scalar_select %p109, %s110, %s111
    %p115 = pneg %p109
    %p116 = scmp.eq.s32.totalorder %s11, 1
    %p117 = por %p115, %p116
    %p118 = scmp.ne.s32.totalorder %s110, %s113
    %p119 = scmp.eq.s32.totalorder %s11, 0
    %p120 = por %p118, %p119
    %p121 = scmp.ne.s32.totalorder %s110, %s113
    %p122 = scmp.eq.s32.totalorder %s16, 1
    %p123 = por %p121, %p122
    %p124 = scmp.ne.s32.totalorder %s113, %s114
    %p125 = scmp.eq.s32.totalorder %s16, 0
    %p126 = por %p124, %p125
    %p127 = scmp.ne.s32.totalorder %s113, %s114
    %p128 = scmp.eq.s32.totalorder %s17, 1
    %p129 = por %p127, %p128
    %p131 = scmp.ne.s32.totalorder %s114, %s130
    %p132 = scmp.eq.s32.totalorder %s17, 0
    %p133 = por %p131, %p132
    %s134 = ssub.s32 %s18, %s37
    %s135 = ssub.s32 %s19, %s33
    %s136 = sor.u32 %s134, %s135
    %p137 = scmp.eq.s32.totalorder %s136, 0
    %s139 = sadd.s32 %s138, 1
    %s140 = scalar_select %p137, %s138, %s139
    %p143 = pneg %p137
    %p144 = scmp.eq.s32.totalorder %s11, 1
    %p145 = por %p143, %p144
    %p146 = scmp.ne.s32.totalorder %s138, %s141
    %p147 = scmp.eq.s32.totalorder %s11, 0
    %p148 = por %p146, %p147
    %p149 = scmp.ne.s32.totalorder %s138, %s141
    %p150 = scmp.eq.s32.totalorder %s16, 1
    %p151 = por %p149, %p150
    %p152 = scmp.ne.s32.totalorder %s141, %s142
    %p153 = scmp.eq.s32.totalorder %s16, 0
    %p154 = por %p152, %p153
    %p155 = scmp.ne.s32.totalorder %s141, %s142
    %p156 = scmp.eq.s32.totalorder %s17, 1
    %p157 = por %p155, %p156
    %p159 = scmp.ne.s32.totalorder %s142, %s158
    %p160 = scmp.eq.s32.totalorder %s17, 0
    %p161 = por %p159, %p160
    %s162 = ssub.s32 %s18, %s37
    %s163 = ssub.s32 %s19, %s33
    %s164 = sor.u32 %s162, %s163
    %p165 = scmp.eq.s32.totalorder %s164, 0
    %s167 = sadd.s32 %s166, 1
    %s168 = scalar_select %p165, %s166, %s167
    %p171 = pneg %p165
    %p172 = scmp.eq.s32.totalorder %s11, 1
    %p173 = por %p171, %p172
    %p174 = scmp.ne.s32.totalorder %s166, %s169
    %p175 = scmp.eq.s32.totalorder %s11, 0
    %p176 = por %p174, %p175
    %p177 = scmp.ne.s32.totalorder %s166, %s169
    %p178 = scmp.eq.s32.totalorder %s16, 1
    %p179 = por %p177, %p178
    %p180 = scmp.ne.s32.totalorder %s169, %s170
    %p181 = scmp.eq.s32.totalorder %s16, 0
    %p182 = por %p180, %p181
    %p183 = scmp.ne.s32.totalorder %s169, %s170
    %p184 = scmp.eq.s32.totalorder %s17, 1
    %p185 = por %p183, %p184
    %p187 = scmp.ne.s32.totalorder %s170, %s186
    %p188 = scmp.eq.s32.totalorder %s17, 0
    %p189 = por %p187, %p188
    %p190 = scmp.le.s32.totalorder 1, %s11
    %p191 = scmp.lt.s32.totalorder %s11, 3
    %p192 = pnand %p190, %p191
    %p193 = pneg %p192
    // Predicated region
    $region9: #{dice_loss.1} parent=5 // pred_check
      _
    $region10: #{dice_loss.1} parent=5 // pred_check_branch
      %195 = sbr.rel (%p192) target = $region12
    $region11: #{dice_loss.1} parent=5 // pred_region
      %s196 = ssub.s32 %s11, 1
    $region12: #{dice_loss.1} parent=5 // pred_fallthru
      _
    %p197 = scmp.lt.s32.totalorder %s11, 2
    // Predicated region
    $region13: #{dice_loss.1} parent=5 // pred_check
      %p198 = pneg %p197
    $region14: #{dice_loss.1} parent=5 // pred_check_branch
      %200 = sbr.rel (%p198) target = $region16
    $region15: #{dice_loss.1} parent=5 // pred_region
      // Predicated region
      $region17: #{dice_loss.1} parent=15 // pred_check
        %p201 = pneg %p58
      $region18: #{dice_loss.1} parent=15 // pred_check_branch
        %203 = sbr.rel (%p201) target = $region20
      $region19: #{dice_loss.1} parent=15 // pred_region
        %s204 = sadd.s32 %s19, %s20
        %p205 = scmp.lt.s32.totalorder %s204, 0
        %s206 = scalar_select %p205, %s204, 0
        %s207 = smul.u32 32, %s206
        %p208 = scmp.lt.s32.totalorder %s18, 1
        %s209 = scalar_select %p208, %s18, 1
        %p210 = scmp.lt.s32.totalorder %s207, 31
        %s211 = scalar_select %p210, %s207, 31
        %s212 = smul.addr %s209, 32
        %s213 = sadd.s32 %s211, %s212
        %s214 = smul.addr %s213, 4
        %s215 = scalar_lea.vmem %s0, %s214
        %s216 = sadd.s32 %s19, %s20
        %p217 = scmp.lt.s32.totalorder %s216, 0
        %s218 = scalar_select %p217, %s216, 0
        %s219 = smul.u32 32, %s218
      $region20: #{dice_loss.1} parent=15 // pred_fallthru
        _
      // Predicated region
      $region21: #{dice_loss.1} parent=15 // pred_check
        %p220 = pneg %p92
      $region22: #{dice_loss.1} parent=15 // pred_check_branch
        %222 = sbr.rel (%p220) target = $region24
      $region23: #{dice_loss.1} parent=15 // pred_region
        %s223 = sadd.s32 %s19, %s20
        %p224 = scmp.lt.s32.totalorder %s223, 0
        %s225 = scalar_select %p224, %s223, 0
        %s226 = smul.u32 32, %s225
        %p227 = scmp.lt.s32.totalorder %s18, 1
        %s228 = scalar_select %p227, %s18, 1
        %p229 = scmp.lt.s32.totalorder %s226, 31
        %s230 = scalar_select %p229, %s226, 31
        %s231 = smul.addr %s228, 32
        %s232 = sadd.s32 %s230, %s231
        %s233 = scalar_lea.vmem %s1, %s232
        %s234 = sadd.s32 %s19, %s20
        %p235 = scmp.lt.s32.totalorder %s234, 0
        %s236 = scalar_select %p235, %s234, 0
        %s237 = smul.u32 32, %s236
      $region24: #{dice_loss.1} parent=15 // pred_fallthru
        _
    $region16: #{dice_loss.1} parent=5 // pred_fallthru
      _
    %p238 = scmp.le.s32.totalorder 1, %s11
    %p239 = scmp.lt.s32.totalorder %s11, 3
    %p240 = pnand %p238, %p239
    %p241 = pneg %p240
    // Predicated region
    $region25: #{dice_loss.1} parent=5 // pred_check
      _
    $region26: #{dice_loss.1} parent=5 // pred_check_branch
      %243 = sbr.rel (%p240) target = $region28
    $region27: #{dice_loss.1} parent=5 // pred_region
      %s244 = ssub.s32 %s11, 1
      %s245 = sadd.s32 %s22, %s23
      %p246 = scmp.lt.s32.totalorder %s245, 0
      %s247 = scalar_select %p246, %s245, 0
      %s248 = smul.u32 32, %s247
      %p249 = scmp.lt.s32.totalorder %s21, 1
      %s250 = scalar_select %p249, %s21, 1
      %p251 = scmp.lt.s32.totalorder %s248, 31
      %s252 = scalar_select %p251, %s248, 31
      %s253 = smul.addr %s250, 32
      %s254 = sadd.s32 %s252, %s253
      %s255 = smul.addr %s254, 4
      %s256 = scalar_lea.vmem %s0, %s255
      %p257 = pneg %p64
      %p258 = pneg %p61
      %s259 = sadd.s32 %s22, %s23
      %p260 = scmp.lt.s32.totalorder %s259, 0
      %s261 = scalar_select %p260, %s259, 0
      %s262 = smul.u32 32, %s261
      %p263 = scmp.lt.s32.totalorder %s21, 1
      %s264 = scalar_select %p263, %s21, 1
      %p265 = scmp.lt.s32.totalorder %s262, 31
      %s266 = scalar_select %p265, %s262, 31
      %s267 = smul.addr %s264, 32
      %s268 = sadd.s32 %s266, %s267
      %s269 = scalar_lea.vmem %s1, %s268
      %p270 = pneg %p98
      %p271 = pneg %p95
      %p272 = pneg %p126
      %p273 = pneg %p123
      %p274 = scmp.lt.s32.totalorder %s21, 1
      %s275 = scalar_select %p274, %s21, 1
      %p276 = scmp.lt.s32.totalorder %s22, 0
      %s277 = scalar_select %p276, %s22, 0
      %s278 = sadd.s32 %s277, %s275
      %s279 = smul.addr %s278, 4
      %s280 = scalar_lea.vmem %s2, %s279
      %p281 = pneg %p154
      %p282 = pneg %p151
      %p283 = scmp.lt.s32.totalorder %s21, 1
      %s284 = scalar_select %p283, %s21, 1
      %p285 = scmp.lt.s32.totalorder %s22, 0
      %s286 = scalar_select %p285, %s22, 0
      %s287 = sadd.s32 %s286, %s284
      %s288 = smul.addr %s287, 4
      %s289 = scalar_lea.vmem %s3, %s288
      %p290 = pneg %p182
      %p291 = pneg %p179
      %p292 = scmp.lt.s32.totalorder %s21, 1
      %s293 = scalar_select %p292, %s21, 1
      %p294 = scmp.lt.s32.totalorder %s22, 0
      %s295 = scalar_select %p294, %s22, 0
      %s296 = sadd.s32 %s295, %s293
      %s297 = smul.addr %s296, 4
      %s298 = scalar_lea.vmem %s4, %s297
      %s299 = sadd.s32 %s22, %s23
      %p300 = scmp.lt.s32.totalorder %s299, 0
      %s301 = scalar_select %p300, %s299, 0
      %s302 = smul.u32 32, %s301
      %p303 = scmp.lt.s32.totalorder %s21, 1
      %s304 = scalar_select %p303, %s21, 1
      %p305 = scmp.lt.s32.totalorder %s302, 31
      %s306 = scalar_select %p305, %s302, 31
      %s307 = smul.addr %s304, 32
      %s308 = sadd.s32 %s306, %s307
      %s309 = smul.addr %s308, 4
      %s310 = scalar_lea.vmem %s0, %s309
      %s311 = sadd.s32 %s22, %s23
      %p312 = scmp.lt.s32.totalorder %s311, 0
      %s313 = scalar_select %p312, %s311, 0
      %s314 = smul.u32 32, %s313
      %s315 = sadd.s32 %s22, %s23
      %p316 = scmp.lt.s32.totalorder %s315, 0
      %s317 = scalar_select %p316, %s315, 0
      %s318 = smul.u32 32, %s317
      %p319 = scmp.lt.s32.totalorder %s21, 1
      %s320 = scalar_select %p319, %s21, 1
      %p321 = scmp.lt.s32.totalorder %s318, 31
      %s322 = scalar_select %p321, %s318, 31
      %s323 = smul.addr %s320, 32
      %s324 = sadd.s32 %s322, %s323
      %s325 = scalar_lea.vmem %s1, %s324
      %s326 = sadd.s32 %s22, %s23
      %p327 = scmp.lt.s32.totalorder %s326, 0
      %s328 = scalar_select %p327, %s326, 0
      %s329 = smul.u32 32, %s328
      %p330 = scmp.lt.s32.totalorder %s21, 1
      %s331 = scalar_select %p330, %s21, 1
      %p332 = scmp.lt.s32.totalorder %s22, 0
      %s333 = scalar_select %p332, %s22, 0
      %s334 = sadd.s32 %s333, %s331
      %s335 = smul.addr %s334, 4
      %s336 = scalar_lea.vmem %s2, %s335
      %p337 = scmp.lt.s32.totalorder %s21, 1
      %s338 = scalar_select %p337, %s21, 1
      %p339 = scmp.lt.s32.totalorder %s22, 0
      %s340 = scalar_select %p339, %s22, 0
      %s341 = sadd.s32 %s340, %s338
      %s342 = smul.addr %s341, 4
      %s343 = scalar_lea.vmem %s3, %s342
      %p344 = scmp.lt.s32.totalorder %s21, 1
      %s345 = scalar_select %p344, %s21, 1
      %p346 = scmp.lt.s32.totalorder %s22, 0
      %s347 = scalar_select %p346, %s22, 0
      %s348 = sadd.s32 %s347, %s345
      %s349 = smul.addr %s348, 4
      %s350 = scalar_lea.vmem %s4, %s349
      %s351 = sadd.s32 %s22, %s23
      %p352 = scmp.eq.s32.totalorder %s23, 0
      // Predicated region
      $region29: #{dice_loss.1} parent=27 // pred_check
        %p353 = pneg %p352
      $region30: #{dice_loss.1} parent=27 // pred_check_branch
        %355 = sbr.rel (%p353) target = $region32
      $region31: #{dice_loss.1} parent=27 // pred_region
        %vm356 = vcmask 3072
        %357 = vst.msk [vmem:[%s336] sm:$0xf] %vm356, 0.0
        %358 = vst.msk [vmem:[%s343] sm:$0xf] %vm356, 0.0
        %359 = vst.msk [vmem:[%s350] sm:$0xf] %vm356, 0.0
      $region32: #{dice_loss.1} parent=27 // pred_fallthru
        _
      %v360 = vld [vmem:[%s310] sm:$0xff]
      %v361 = vld [vmem:[%s310 + $0x8] sm:$0xff]
      %v362 = vld [vmem:[%s310 + $0x10] sm:$0xff]
      %v363 = vld [vmem:[%s310 + $0x18] sm:$0xff]
      %v364 = vld [vmem:[%s310 + $0x20] sm:$0xff]
      %v365 = vld [vmem:[%s310 + $0x28] sm:$0xff]
      %v366 = vld [vmem:[%s310 + $0x30] sm:$0xff]
      %v367 = vld [vmem:[%s310 + $0x38] sm:$0xff]
      %v368 = vld [vmem:[%s310 + $0x40] sm:$0xff]
      %v369 = vld [vmem:[%s310 + $0x48] sm:$0xff]
      %v370 = vld [vmem:[%s310 + $0x50] sm:$0xff]
      %v371 = vld [vmem:[%s310 + $0x58] sm:$0xff]
      %v372 = vld [vmem:[%s310 + $0x60] sm:$0xff]
      %v373 = vld [vmem:[%s310 + $0x68] sm:$0xff]
      %v374 = vld [vmem:[%s310 + $0x70] sm:$0xff]
      %v375 = vld [vmem:[%s310 + $0x78] sm:$0xff]
      %v376 = vld [vmem:[%s325] sm:$0xff]
      %v377 = vld [vmem:[%s325 + $0x8] sm:$0xff]
      %v378 = vld [vmem:[%s325 + $0x10] sm:$0xff]
      %v379 = vld [vmem:[%s325 + $0x18] sm:$0xff]
      %v380 = vlaneseq
      %v381 = vshrl.u32 %v380, 7
      %p382 = scmp.lt.s32.totalorder %s351, 1
      // Predicated region
      $region33: #{dice_loss.1} parent=27 // pred_check
        %p383 = pneg %p382
      $region34: #{dice_loss.1} parent=27 // pred_check_branch
        %385 = sbr.rel (%p383) target = $region36
      $region35: #{dice_loss.1} parent=27 // pred_region
        %v402 = vcombine.high %v360, %v360
        %v403 = vcombine.high %v361, %v361
        %v404 = vcombine.high %v362, %v362
        %v405 = vcombine.high %v363, %v363
        %v406 = vcombine.high %v364, %v364
        %v407 = vcombine.high %v365, %v365
        %v408 = vcombine.high %v366, %v366
        %v409 = vcombine.high %v367, %v367
        %v410 = vcombine.high %v368, %v368
        %v411 = vcombine.high %v369, %v369
        %v412 = vcombine.high %v370, %v370
        %v413 = vcombine.high %v371, %v371
        %v414 = vcombine.high %v372, %v372
        %v415 = vcombine.high %v373, %v373
        %v416 = vcombine.high %v374, %v374
        %v417 = vcombine.high %v375, %v375
        %vm434 = vcmask 1043456
        %v435 = vsel %vm434, %v360, -inf
        %v436 = vrot.slane %v435, 4
        %v437 = vmax.f32 %v435, %v436
        %v438 = vrot.slane %v437, 2
        %v439 = vmax.f32 %v437, %v438
        %v440 = vrot.slane %v439, 1
        %v441 = vmax.f32 %v439, %v440
        %v442 = vsel %vm434, %v402, -inf
        %v443 = vrot.slane %v442, 4
        %v444 = vmax.f32 %v442, %v443
        %v445 = vrot.slane %v444, 2
        %v446 = vmax.f32 %v444, %v445
        %v447 = vrot.slane %v446, 1
        %v448 = vmax.f32 %v446, %v447
        %v449 = vsel %vm434, %v361, -inf
        %v450 = vrot.slane %v449, 4
        %v451 = vmax.f32 %v449, %v450
        %v452 = vrot.slane %v451, 2
        %v453 = vmax.f32 %v451, %v452
        %v454 = vrot.slane %v453, 1
        %v455 = vmax.f32 %v453, %v454
        %v456 = vsel %vm434, %v403, -inf
        %v457 = vrot.slane %v456, 4
        %v458 = vmax.f32 %v456, %v457
        %v459 = vrot.slane %v458, 2
        %v460 = vmax.f32 %v458, %v459
        %v461 = vrot.slane %v460, 1
        %v462 = vmax.f32 %v460, %v461
        %v463 = vsel %vm434, %v362, -inf
        %v464 = vrot.slane %v463, 4
        %v465 = vmax.f32 %v463, %v464
        %v466 = vrot.slane %v465, 2
        %v467 = vmax.f32 %v465, %v466
        %v468 = vrot.slane %v467, 1
        %v469 = vmax.f32 %v467, %v468
        %v470 = vsel %vm434, %v404, -inf
        %v471 = vrot.slane %v470, 4
        %v472 = vmax.f32 %v470, %v471
        %v473 = vrot.slane %v472, 2
        %v474 = vmax.f32 %v472, %v473
        %v475 = vrot.slane %v474, 1
        %v476 = vmax.f32 %v474, %v475
        %v477 = vsel %vm434, %v363, -inf
        %v478 = vrot.slane %v477, 4
        %v479 = vmax.f32 %v477, %v478
        %v480 = vrot.slane %v479, 2
        %v481 = vmax.f32 %v479, %v480
        %v482 = vrot.slane %v481, 1
        %v483 = vmax.f32 %v481, %v482
        %v484 = vsel %vm434, %v405, -inf
        %v485 = vrot.slane %v484, 4
        %v486 = vmax.f32 %v484, %v485
        %v487 = vrot.slane %v486, 2
        %v488 = vmax.f32 %v486, %v487
        %v489 = vrot.slane %v488, 1
        %v490 = vmax.f32 %v488, %v489
        %v491 = vsel %vm434, %v364, -inf
        %v492 = vrot.slane %v491, 4
        %v493 = vmax.f32 %v491, %v492
        %v494 = vrot.slane %v493, 2
        %v495 = vmax.f32 %v493, %v494
        %v496 = vrot.slane %v495, 1
        %v497 = vmax.f32 %v495, %v496
        %v498 = vsel %vm434, %v406, -inf
        %v499 = vrot.slane %v498, 4
        %v500 = vmax.f32 %v498, %v499
        %v501 = vrot.slane %v500, 2
        %v502 = vmax.f32 %v500, %v501
        %v503 = vrot.slane %v502, 1
        %v504 = vmax.f32 %v502, %v503
        %v505 = vsel %vm434, %v365, -inf
        %v506 = vrot.slane %v505, 4
        %v507 = vmax.f32 %v505, %v506
        %v508 = vrot.slane %v507, 2
        %v509 = vmax.f32 %v507, %v508
        %v510 = vrot.slane %v509, 1
        %v511 = vmax.f32 %v509, %v510
        %v512 = vsel %vm434, %v407, -inf
        %v513 = vrot.slane %v512, 4
        %v514 = vmax.f32 %v512, %v513
        %v515 = vrot.slane %v514, 2
        %v516 = vmax.f32 %v514, %v515
        %v517 = vrot.slane %v516, 1
        %v518 = vmax.f32 %v516, %v517
        %v519 = vsel %vm434, %v366, -inf
        %v520 = vrot.slane %v519, 4
        %v521 = vmax.f32 %v519, %v520
        %v522 = vrot.slane %v521, 2
        %v523 = vmax.f32 %v521, %v522
        %v524 = vrot.slane %v523, 1
        %v525 = vmax.f32 %v523, %v524
        %v526 = vsel %vm434, %v408, -inf
        %v527 = vrot.slane %v526, 4
        %v528 = vmax.f32 %v526, %v527
        %v529 = vrot.slane %v528, 2
        %v530 = vmax.f32 %v528, %v529
        %v531 = vrot.slane %v530, 1
        %v532 = vmax.f32 %v530, %v531
        %v533 = vsel %vm434, %v367, -inf
        %v534 = vrot.slane %v533, 4
        %v535 = vmax.f32 %v533, %v534
        %v536 = vrot.slane %v535, 2
        %v537 = vmax.f32 %v535, %v536
        %v538 = vrot.slane %v537, 1
        %v539 = vmax.f32 %v537, %v538
        %v540 = vsel %vm434, %v409, -inf
        %v541 = vrot.slane %v540, 4
        %v542 = vmax.f32 %v540, %v541
        %v543 = vrot.slane %v542, 2
        %v544 = vmax.f32 %v542, %v543
        %v545 = vrot.slane %v544, 1
        %v546 = vmax.f32 %v544, %v545
        %v547 = vsel %vm434, %v368, -inf
        %v548 = vrot.slane %v547, 4
        %v549 = vmax.f32 %v547, %v548
        %v550 = vrot.slane %v549, 2
        %v551 = vmax.f32 %v549, %v550
        %v552 = vrot.slane %v551, 1
        %v553 = vmax.f32 %v551, %v552
        %v554 = vsel %vm434, %v410, -inf
        %v555 = vrot.slane %v554, 4
        %v556 = vmax.f32 %v554, %v555
        %v557 = vrot.slane %v556, 2
        %v558 = vmax.f32 %v556, %v557
        %v559 = vrot.slane %v558, 1
        %v560 = vmax.f32 %v558, %v559
        %v561 = vsel %vm434, %v369, -inf
        %v562 = vrot.slane %v561, 4
        %v563 = vmax.f32 %v561, %v562
        %v564 = vrot.slane %v563, 2
        %v565 = vmax.f32 %v563, %v564
        %v566 = vrot.slane %v565, 1
        %v567 = vmax.f32 %v565, %v566
        %v568 = vsel %vm434, %v411, -inf
        %v569 = vrot.slane %v568, 4
        %v570 = vmax.f32 %v568, %v569
        %v571 = vrot.slane %v570, 2
        %v572 = vmax.f32 %v570, %v571
        %v573 = vrot.slane %v572, 1
        %v574 = vmax.f32 %v572, %v573
        %v575 = vsel %vm434, %v370, -inf
        %v576 = vrot.slane %v575, 4
        %v577 = vmax.f32 %v575, %v576
        %v578 = vrot.slane %v577, 2
        %v579 = vmax.f32 %v577, %v578
        %v580 = vrot.slane %v579, 1
        %v581 = vmax.f32 %v579, %v580
        %v582 = vsel %vm434, %v412, -inf
        %v583 = vrot.slane %v582, 4
        %v584 = vmax.f32 %v582, %v583
        %v585 = vrot.slane %v584, 2
        %v586 = vmax.f32 %v584, %v585
        %v587 = vrot.slane %v586, 1
        %v588 = vmax.f32 %v586, %v587
        %v589 = vsel %vm434, %v371, -inf
        %v590 = vrot.slane %v589, 4
        %v591 = vmax.f32 %v589, %v590
        %v592 = vrot.slane %v591, 2
        %v593 = vmax.f32 %v591, %v592
        %v594 = vrot.slane %v593, 1
        %v595 = vmax.f32 %v593, %v594
        %v596 = vsel %vm434, %v413, -inf
        %v597 = vrot.slane %v596, 4
        %v598 = vmax.f32 %v596, %v597
        %v599 = vrot.slane %v598, 2
        %v600 = vmax.f32 %v598, %v599
        %v601 = vrot.slane %v600, 1
        %v602 = vmax.f32 %v600, %v601
        %v603 = vsel %vm434, %v372, -inf
        %v604 = vrot.slane %v603, 4
        %v605 = vmax.f32 %v603, %v604
        %v606 = vrot.slane %v605, 2
        %v607 = vmax.f32 %v605, %v606
        %v608 = vrot.slane %v607, 1
        %v609 = vmax.f32 %v607, %v608
        %v610 = vsel %vm434, %v414, -inf
        %v611 = vrot.slane %v610, 4
        %v612 = vmax.f32 %v610, %v611
        %v613 = vrot.slane %v612, 2
        %v614 = vmax.f32 %v612, %v613
        %v615 = vrot.slane %v614, 1
        %v616 = vmax.f32 %v614, %v615
        %v617 = vsel %vm434, %v373, -inf
        %v618 = vrot.slane %v617, 4
        %v619 = vmax.f32 %v617, %v618
        %v620 = vrot.slane %v619, 2
        %v621 = vmax.f32 %v619, %v620
        %v622 = vrot.slane %v621, 1
        %v623 = vmax.f32 %v621, %v622
        %v624 = vsel %vm434, %v415, -inf
        %v625 = vrot.slane %v624, 4
        %v626 = vmax.f32 %v624, %v625
        %v627 = vrot.slane %v626, 2
        %v628 = vmax.f32 %v626, %v627
        %v629 = vrot.slane %v628, 1
        %v630 = vmax.f32 %v628, %v629
        %v631 = vsel %vm434, %v374, -inf
        %v632 = vrot.slane %v631, 4
        %v633 = vmax.f32 %v631, %v632
        %v634 = vrot.slane %v633, 2
        %v635 = vmax.f32 %v633, %v634
        %v636 = vrot.slane %v635, 1
        %v637 = vmax.f32 %v635, %v636
        %v638 = vsel %vm434, %v416, -inf
        %v639 = vrot.slane %v638, 4
        %v640 = vmax.f32 %v638, %v639
        %v641 = vrot.slane %v640, 2
        %v642 = vmax.f32 %v640, %v641
        %v643 = vrot.slane %v642, 1
        %v644 = vmax.f32 %v642, %v643
        %v645 = vsel %vm434, %v375, -inf
        %v646 = vrot.slane %v645, 4
        %v647 = vmax.f32 %v645, %v646
        %v648 = vrot.slane %v647, 2
        %v649 = vmax.f32 %v647, %v648
        %v650 = vrot.slane %v649, 1
        %v651 = vmax.f32 %v649, %v650
        %v652 = vsel %vm434, %v417, -inf
        %v653 = vrot.slane %v652, 4
        %v654 = vmax.f32 %v652, %v653
        %v655 = vrot.slane %v654, 2
        %v656 = vmax.f32 %v654, %v655
        %v657 = vrot.slane %v656, 1
        %v658 = vmax.f32 %v656, %v657
        %v691 = vcombine.low %v441, %v448
        %v692 = vcombine.low %v455, %v462
        %v693 = vcombine.low %v469, %v476
        %v694 = vcombine.low %v483, %v490
        %v695 = vcombine.low %v497, %v504
        %v696 = vcombine.low %v511, %v518
        %v697 = vcombine.low %v525, %v532
        %v698 = vcombine.low %v539, %v546
        %v699 = vcombine.low %v553, %v560
        %v700 = vcombine.low %v567, %v574
        %v701 = vcombine.low %v581, %v588
        %v702 = vcombine.low %v595, %v602
        %v703 = vcombine.low %v609, %v616
        %v704 = vcombine.low %v623, %v630
        %v705 = vcombine.low %v637, %v644
        %v706 = vcombine.low %v651, %v658
        %v723 = vsub.f32 %v360, %v691
        %v724 = vsub.f32 %v361, %v692
        %v725 = vsub.f32 %v362, %v693
        %v726 = vsub.f32 %v363, %v694
        %v727 = vsub.f32 %v364, %v695
        %v728 = vsub.f32 %v365, %v696
        %v729 = vsub.f32 %v366, %v697
        %v730 = vsub.f32 %v367, %v698
        %v731 = vsub.f32 %v368, %v699
        %v732 = vsub.f32 %v369, %v700
        %v733 = vsub.f32 %v370, %v701
        %v734 = vsub.f32 %v371, %v702
        %v735 = vsub.f32 %v372, %v703
        %v736 = vsub.f32 %v373, %v704
        %v737 = vsub.f32 %v374, %v705
        %v738 = vsub.f32 %v375, %v706
        %v739 = vmul.f32 %v723, 1.442695
        %v740 = vpow.pop %v739
        %v741 = vmul.f32 %v724, 1.442695
        %v742 = vpow.pop %v741
        %v743 = vmul.f32 %v725, 1.442695
        %v744 = vpow.pop %v743
        %v745 = vmul.f32 %v726, 1.442695
        %v746 = vpow.pop %v745
        %v747 = vmul.f32 %v727, 1.442695
        %v748 = vpow.pop %v747
        %v749 = vmul.f32 %v728, 1.442695
        %v750 = vpow.pop %v749
        %v751 = vmul.f32 %v729, 1.442695
        %v752 = vpow.pop %v751
        %v753 = vmul.f32 %v730, 1.442695
        %v754 = vpow.pop %v753
        %v755 = vmul.f32 %v731, 1.442695
        %v756 = vpow.pop %v755
        %v757 = vmul.f32 %v732, 1.442695
        %v758 = vpow.pop %v757
        %v759 = vmul.f32 %v733, 1.442695
        %v760 = vpow.pop %v759
        %v761 = vmul.f32 %v734, 1.442695
        %v762 = vpow.pop %v761
        %v763 = vmul.f32 %v735, 1.442695
        %v764 = vpow.pop %v763
        %v765 = vmul.f32 %v736, 1.442695
        %v766 = vpow.pop %v765
        %v767 = vmul.f32 %v737, 1.442695
        %v768 = vpow.pop %v767
        %v769 = vmul.f32 %v738, 1.442695
        %v770 = vpow.pop %v769
        %v787 = vcombine.high %v740, %v740
        %v788 = vcombine.high %v742, %v742
        %v789 = vcombine.high %v744, %v744
        %v790 = vcombine.high %v746, %v746
        %v791 = vcombine.high %v748, %v748
        %v792 = vcombine.high %v750, %v750
        %v793 = vcombine.high %v752, %v752
        %v794 = vcombine.high %v754, %v754
        %v795 = vcombine.high %v756, %v756
        %v796 = vcombine.high %v758, %v758
        %v797 = vcombine.high %v760, %v760
        %v798 = vcombine.high %v762, %v762
        %v799 = vcombine.high %v764, %v764
        %v800 = vcombine.high %v766, %v766
        %v801 = vcombine.high %v768, %v768
        %v802 = vcombine.high %v770, %v770
        %v819 = vsel %vm434, %v740, 0.0
        %v820 = vrot.slane %v819, 4
        %v821 = vadd.f32 %v819, %v820
        %v822 = vrot.slane %v821, 2
        %v823 = vadd.f32 %v821, %v822
        %v824 = vrot.slane %v823, 1
        %v825 = vadd.f32 %v823, %v824
        %v826 = vsel %vm434, %v787, 0.0
        %v827 = vrot.slane %v826, 4
        %v828 = vadd.f32 %v826, %v827
        %v829 = vrot.slane %v828, 2
        %v830 = vadd.f32 %v828, %v829
        %v831 = vrot.slane %v830, 1
        %v832 = vadd.f32 %v830, %v831
        %v833 = vsel %vm434, %v742, 0.0
        %v834 = vrot.slane %v833, 4
        %v835 = vadd.f32 %v833, %v834
        %v836 = vrot.slane %v835, 2
        %v837 = vadd.f32 %v835, %v836
        %v838 = vrot.slane %v837, 1
        %v839 = vadd.f32 %v837, %v838
        %v840 = vsel %vm434, %v788, 0.0
        %v841 = vrot.slane %v840, 4
        %v842 = vadd.f32 %v840, %v841
        %v843 = vrot.slane %v842, 2
        %v844 = vadd.f32 %v842, %v843
        %v845 = vrot.slane %v844, 1
        %v846 = vadd.f32 %v844, %v845
        %v847 = vsel %vm434, %v744, 0.0
        %v848 = vrot.slane %v847, 4
        %v849 = vadd.f32 %v847, %v848
        %v850 = vrot.slane %v849, 2
        %v851 = vadd.f32 %v849, %v850
        %v852 = vrot.slane %v851, 1
        %v853 = vadd.f32 %v851, %v852
        %v854 = vsel %vm434, %v789, 0.0
        %v855 = vrot.slane %v854, 4
        %v856 = vadd.f32 %v854, %v855
        %v857 = vrot.slane %v856, 2
        %v858 = vadd.f32 %v856, %v857
        %v859 = vrot.slane %v858, 1
        %v860 = vadd.f32 %v858, %v859
        %v861 = vsel %vm434, %v746, 0.0
        %v862 = vrot.slane %v861, 4
        %v863 = vadd.f32 %v861, %v862
        %v864 = vrot.slane %v863, 2
        %v865 = vadd.f32 %v863, %v864
        %v866 = vrot.slane %v865, 1
        %v867 = vadd.f32 %v865, %v866
        %v868 = vsel %vm434, %v790, 0.0
        %v869 = vrot.slane %v868, 4
        %v870 = vadd.f32 %v868, %v869
        %v871 = vrot.slane %v870, 2
        %v872 = vadd.f32 %v870, %v871
        %v873 = vrot.slane %v872, 1
        %v874 = vadd.f32 %v872, %v873
        %v875 = vsel %vm434, %v748, 0.0
        %v876 = vrot.slane %v875, 4
        %v877 = vadd.f32 %v875, %v876
        %v878 = vrot.slane %v877, 2
        %v879 = vadd.f32 %v877, %v878
        %v880 = vrot.slane %v879, 1
        %v881 = vadd.f32 %v879, %v880
        %v882 = vsel %vm434, %v791, 0.0
        %v883 = vrot.slane %v882, 4
        %v884 = vadd.f32 %v882, %v883
        %v885 = vrot.slane %v884, 2
        %v886 = vadd.f32 %v884, %v885
        %v887 = vrot.slane %v886, 1
        %v888 = vadd.f32 %v886, %v887
        %v889 = vsel %vm434, %v750, 0.0
        %v890 = vrot.slane %v889, 4
        %v891 = vadd.f32 %v889, %v890
        %v892 = vrot.slane %v891, 2
        %v893 = vadd.f32 %v891, %v892
        %v894 = vrot.slane %v893, 1
        %v895 = vadd.f32 %v893, %v894
        %v896 = vsel %vm434, %v792, 0.0
        %v897 = vrot.slane %v896, 4
        %v898 = vadd.f32 %v896, %v897
        %v899 = vrot.slane %v898, 2
        %v900 = vadd.f32 %v898, %v899
        %v901 = vrot.slane %v900, 1
        %v902 = vadd.f32 %v900, %v901
        %v903 = vsel %vm434, %v752, 0.0
        %v904 = vrot.slane %v903, 4
        %v905 = vadd.f32 %v903, %v904
        %v906 = vrot.slane %v905, 2
        %v907 = vadd.f32 %v905, %v906
        %v908 = vrot.slane %v907, 1
        %v909 = vadd.f32 %v907, %v908
        %v910 = vsel %vm434, %v793, 0.0
        %v911 = vrot.slane %v910, 4
        %v912 = vadd.f32 %v910, %v911
        %v913 = vrot.slane %v912, 2
        %v914 = vadd.f32 %v912, %v913
        %v915 = vrot.slane %v914, 1
        %v916 = vadd.f32 %v914, %v915
        %v917 = vsel %vm434, %v754, 0.0
        %v918 = vrot.slane %v917, 4
        %v919 = vadd.f32 %v917, %v918
        %v920 = vrot.slane %v919, 2
        %v921 = vadd.f32 %v919, %v920
        %v922 = vrot.slane %v921, 1
        %v923 = vadd.f32 %v921, %v922
        %v924 = vsel %vm434, %v794, 0.0
        %v925 = vrot.slane %v924, 4
        %v926 = vadd.f32 %v924, %v925
        %v927 = vrot.slane %v926, 2
        %v928 = vadd.f32 %v926, %v927
        %v929 = vrot.slane %v928, 1
        %v930 = vadd.f32 %v928, %v929
        %v931 = vsel %vm434, %v756, 0.0
        %v932 = vrot.slane %v931, 4
        %v933 = vadd.f32 %v931, %v932
        %v934 = vrot.slane %v933, 2
        %v935 = vadd.f32 %v933, %v934
        %v936 = vrot.slane %v935, 1
        %v937 = vadd.f32 %v935, %v936
        %v938 = vsel %vm434, %v795, 0.0
        %v939 = vrot.slane %v938, 4
        %v940 = vadd.f32 %v938, %v939
        %v941 = vrot.slane %v940, 2
        %v942 = vadd.f32 %v940, %v941
        %v943 = vrot.slane %v942, 1
        %v944 = vadd.f32 %v942, %v943
        %v945 = vsel %vm434, %v758, 0.0
        %v946 = vrot.slane %v945, 4
        %v947 = vadd.f32 %v945, %v946
        %v948 = vrot.slane %v947, 2
        %v949 = vadd.f32 %v947, %v948
        %v950 = vrot.slane %v949, 1
        %v951 = vadd.f32 %v949, %v950
        %v952 = vsel %vm434, %v796, 0.0
        %v953 = vrot.slane %v952, 4
        %v954 = vadd.f32 %v952, %v953
        %v955 = vrot.slane %v954, 2
        %v956 = vadd.f32 %v954, %v955
        %v957 = vrot.slane %v956, 1
        %v958 = vadd.f32 %v956, %v957
        %v959 = vsel %vm434, %v760, 0.0
        %v960 = vrot.slane %v959, 4
        %v961 = vadd.f32 %v959, %v960
        %v962 = vrot.slane %v961, 2
        %v963 = vadd.f32 %v961, %v962
        %v964 = vrot.slane %v963, 1
        %v965 = vadd.f32 %v963, %v964
        %v966 = vsel %vm434, %v797, 0.0
        %v967 = vrot.slane %v966, 4
        %v968 = vadd.f32 %v966, %v967
        %v969 = vrot.slane %v968, 2
        %v970 = vadd.f32 %v968, %v969
        %v971 = vrot.slane %v970, 1
        %v972 = vadd.f32 %v970, %v971
        %v973 = vsel %vm434, %v762, 0.0
        %v974 = vrot.slane %v973, 4
        %v975 = vadd.f32 %v973, %v974
        %v976 = vrot.slane %v975, 2
        %v977 = vadd.f32 %v975, %v976
        %v978 = vrot.slane %v977, 1
        %v979 = vadd.f32 %v977, %v978
        %v980 = vsel %vm434, %v798, 0.0
        %v981 = vrot.slane %v980, 4
        %v982 = vadd.f32 %v980, %v981
        %v983 = vrot.slane %v982, 2
        %v984 = vadd.f32 %v982, %v983
        %v985 = vrot.slane %v984, 1
        %v986 = vadd.f32 %v984, %v985
        %v987 = vsel %vm434, %v764, 0.0
        %v988 = vrot.slane %v987, 4
        %v989 = vadd.f32 %v987, %v988
        %v990 = vrot.slane %v989, 2
        %v991 = vadd.f32 %v989, %v990
        %v992 = vrot.slane %v991, 1
        %v993 = vadd.f32 %v991, %v992
        %v994 = vsel %vm434, %v799, 0.0
        %v995 = vrot.slane %v994, 4
        %v996 = vadd.f32 %v994, %v995
        %v997 = vrot.slane %v996, 2
        %v998 = vadd.f32 %v996, %v997
        %v999 = vrot.slane %v998, 1
        %v1000 = vadd.f32 %v998, %v999
        %v1001 = vsel %vm434, %v766, 0.0
        %v1002 = vrot.slane %v1001, 4
        %v1003 = vadd.f32 %v1001, %v1002
        %v1004 = vrot.slane %v1003, 2
        %v1005 = vadd.f32 %v1003, %v1004
        %v1006 = vrot.slane %v1005, 1
        %v1007 = vadd.f32 %v1005, %v1006
        %v1008 = vsel %vm434, %v800, 0.0
        %v1009 = vrot.slane %v1008, 4
        %v1010 = vadd.f32 %v1008, %v1009
        %v1011 = vrot.slane %v1010, 2
        %v1012 = vadd.f32 %v1010, %v1011
        %v1013 = vrot.slane %v1012, 1
        %v1014 = vadd.f32 %v1012, %v1013
        %v1015 = vsel %vm434, %v768, 0.0
        %v1016 = vrot.slane %v1015, 4
        %v1017 = vadd.f32 %v1015, %v1016
        %v1018 = vrot.slane %v1017, 2
        %v1019 = vadd.f32 %v1017, %v1018
        %v1020 = vrot.slane %v1019, 1
        %v1021 = vadd.f32 %v1019, %v1020
        %v1022 = vsel %vm434, %v801, 0.0
        %v1023 = vrot.slane %v1022, 4
        %v1024 = vadd.f32 %v1022, %v1023
        %v1025 = vrot.slane %v1024, 2
        %v1026 = vadd.f32 %v1024, %v1025
        %v1027 = vrot.slane %v1026, 1
        %v1028 = vadd.f32 %v1026, %v1027
        %v1029 = vsel %vm434, %v770, 0.0
        %v1030 = vrot.slane %v1029, 4
        %v1031 = vadd.f32 %v1029, %v1030
        %v1032 = vrot.slane %v1031, 2
        %v1033 = vadd.f32 %v1031, %v1032
        %v1034 = vrot.slane %v1033, 1
        %v1035 = vadd.f32 %v1033, %v1034
        %v1036 = vsel %vm434, %v802, 0.0
        %v1037 = vrot.slane %v1036, 4
        %v1038 = vadd.f32 %v1036, %v1037
        %v1039 = vrot.slane %v1038, 2
        %v1040 = vadd.f32 %v1038, %v1039
        %v1041 = vrot.slane %v1040, 1
        %v1042 = vadd.f32 %v1040, %v1041
        %v1043 = vrcp.pop %v825
        %v1044 = vrcp.pop %v832
        %v1045 = vrcp.pop %v839
        %v1046 = vrcp.pop %v846
        %v1047 = vrcp.pop %v853
        %v1048 = vrcp.pop %v860
        %v1049 = vrcp.pop %v867
        %v1050 = vrcp.pop %v874
        %v1051 = vrcp.pop %v881
        %v1052 = vrcp.pop %v888
        %v1053 = vrcp.pop %v895
        %v1054 = vrcp.pop %v902
        %v1055 = vrcp.pop %v909
        %v1056 = vrcp.pop %v916
        %v1057 = vrcp.pop %v923
        %v1058 = vrcp.pop %v930
        %v1059 = vrcp.pop %v937
        %v1060 = vrcp.pop %v944
        %v1061 = vrcp.pop %v951
        %v1062 = vrcp.pop %v958
        %v1063 = vrcp.pop %v965
        %v1064 = vrcp.pop %v972
        %v1065 = vrcp.pop %v979
        %v1066 = vrcp.pop %v986
        %v1067 = vrcp.pop %v993
        %v1068 = vrcp.pop %v1000
        %v1069 = vrcp.pop %v1007
        %v1070 = vrcp.pop %v1014
        %v1071 = vrcp.pop %v1021
        %v1072 = vrcp.pop %v1028
        %v1073 = vrcp.pop %v1035
        %v1074 = vrcp.pop %v1042
        %v1107 = vcombine.low %v1043, %v1044
        %v1108 = vcombine.low %v1045, %v1046
        %v1109 = vcombine.low %v1047, %v1048
        %v1110 = vcombine.low %v1049, %v1050
        %v1111 = vcombine.low %v1051, %v1052
        %v1112 = vcombine.low %v1053, %v1054
        %v1113 = vcombine.low %v1055, %v1056
        %v1114 = vcombine.low %v1057, %v1058
        %v1115 = vcombine.low %v1059, %v1060
        %v1116 = vcombine.low %v1061, %v1062
        %v1117 = vcombine.low %v1063, %v1064
        %v1118 = vcombine.low %v1065, %v1066
        %v1119 = vcombine.low %v1067, %v1068
        %v1120 = vcombine.low %v1069, %v1070
        %v1121 = vcombine.low %v1071, %v1072
        %v1122 = vcombine.low %v1073, %v1074
        %v1139 = vmul.f32 %v740, %v1107
        %v1140 = vmul.f32 %v742, %v1108
        %v1141 = vmul.f32 %v744, %v1109
        %v1142 = vmul.f32 %v746, %v1110
        %v1143 = vmul.f32 %v748, %v1111
        %v1144 = vmul.f32 %v750, %v1112
        %v1145 = vmul.f32 %v752, %v1113
        %v1146 = vmul.f32 %v754, %v1114
        %v1147 = vmul.f32 %v756, %v1115
        %v1148 = vmul.f32 %v758, %v1116
        %v1149 = vmul.f32 %v760, %v1117
        %v1150 = vmul.f32 %v762, %v1118
        %v1151 = vmul.f32 %v764, %v1119
        %v1152 = vmul.f32 %v766, %v1120
        %v1153 = vmul.f32 %v768, %v1121
        %v1154 = vmul.f32 %v770, %v1122
        %v1155 = vlaneseq
        %v1156 = vshrl.u32 %v1155, 7
        %v1157 = vsub.s32 0, %v1156
        %v1158 = vrot.slane %v376, %v1157
        %v1159 = vlaneseq
        %v1160 = vshrl.u32 %v1159, 7
        %v1161 = vsub.s32 1, %v1160
        %v1162 = vrot.slane %v376, %v1161
        %v1163 = vlaneseq
        %v1164 = vshrl.u32 %v1163, 7
        %v1165 = vsub.s32 2, %v1164
        %v1166 = vrot.slane %v376, %v1165
        %v1167 = vlaneseq
        %v1168 = vshrl.u32 %v1167, 7
        %v1169 = vsub.s32 3, %v1168
        %v1170 = vrot.slane %v376, %v1169
        %v1171 = vlaneseq
        %v1172 = vshrl.u32 %v1171, 7
        %v1173 = vsub.s32 4, %v1172
        %v1174 = vrot.slane %v376, %v1173
        %v1175 = vlaneseq
        %v1176 = vshrl.u32 %v1175, 7
        %v1177 = vsub.s32 5, %v1176
        %v1178 = vrot.slane %v376, %v1177
        %v1179 = vlaneseq
        %v1180 = vshrl.u32 %v1179, 7
        %v1181 = vsub.s32 6, %v1180
        %v1182 = vrot.slane %v376, %v1181
        %v1183 = vlaneseq
        %v1184 = vshrl.u32 %v1183, 7
        %v1185 = vsub.s32 7, %v1184
        %v1186 = vrot.slane %v376, %v1185
        %v1187 = vlaneseq
        %v1188 = vshrl.u32 %v1187, 7
        %v1189 = vsub.s32 0, %v1188
        %v1190 = vrot.slane %v377, %v1189
        %v1191 = vlaneseq
        %v1192 = vshrl.u32 %v1191, 7
        %v1193 = vsub.s32 1, %v1192
        %v1194 = vrot.slane %v377, %v1193
        %v1195 = vlaneseq
        %v1196 = vshrl.u32 %v1195, 7
        %v1197 = vsub.s32 2, %v1196
        %v1198 = vrot.slane %v377, %v1197
        %v1199 = vlaneseq
        %v1200 = vshrl.u32 %v1199, 7
        %v1201 = vsub.s32 3, %v1200
        %v1202 = vrot.slane %v377, %v1201
        %v1203 = vlaneseq
        %v1204 = vshrl.u32 %v1203, 7
        %v1205 = vsub.s32 4, %v1204
        %v1206 = vrot.slane %v377, %v1205
        %v1207 = vlaneseq
        %v1208 = vshrl.u32 %v1207, 7
        %v1209 = vsub.s32 5, %v1208
        %v1210 = vrot.slane %v377, %v1209
        %v1211 = vlaneseq
        %v1212 = vshrl.u32 %v1211, 7
        %v1213 = vsub.s32 6, %v1212
        %v1214 = vrot.slane %v377, %v1213
        %v1215 = vlaneseq
        %v1216 = vshrl.u32 %v1215, 7
        %v1217 = vsub.s32 7, %v1216
        %v1218 = vrot.slane %v377, %v1217
        %v1219 = vlaneseq
        %v1220 = vshrl.u32 %v1219, 7
        %v1221 = vsub.s32 0, %v1220
        %v1222 = vrot.slane %v378, %v1221
        %v1223 = vlaneseq
        %v1224 = vshrl.u32 %v1223, 7
        %v1225 = vsub.s32 1, %v1224
        %v1226 = vrot.slane %v378, %v1225
        %v1227 = vlaneseq
        %v1228 = vshrl.u32 %v1227, 7
        %v1229 = vsub.s32 2, %v1228
        %v1230 = vrot.slane %v378, %v1229
        %v1231 = vlaneseq
        %v1232 = vshrl.u32 %v1231, 7
        %v1233 = vsub.s32 3, %v1232
        %v1234 = vrot.slane %v378, %v1233
        %v1235 = vlaneseq
        %v1236 = vshrl.u32 %v1235, 7
        %v1237 = vsub.s32 4, %v1236
        %v1238 = vrot.slane %v378, %v1237
        %v1239 = vlaneseq
        %v1240 = vshrl.u32 %v1239, 7
        %v1241 = vsub.s32 5, %v1240
        %v1242 = vrot.slane %v378, %v1241
        %v1243 = vlaneseq
        %v1244 = vshrl.u32 %v1243, 7
        %v1245 = vsub.s32 6, %v1244
        %v1246 = vrot.slane %v378, %v1245
        %v1247 = vlaneseq
        %v1248 = vshrl.u32 %v1247, 7
        %v1249 = vsub.s32 7, %v1248
        %v1250 = vrot.slane %v378, %v1249
        %v1251 = vlaneseq
        %v1252 = vshrl.u32 %v1251, 7
        %v1253 = vsub.s32 0, %v1252
        %v1254 = vrot.slane %v379, %v1253
        %v1255 = vlaneseq
        %v1256 = vshrl.u32 %v1255, 7
        %v1257 = vsub.s32 1, %v1256
        %v1258 = vrot.slane %v379, %v1257
        %v1259 = vlaneseq
        %v1260 = vshrl.u32 %v1259, 7
        %v1261 = vsub.s32 2, %v1260
        %v1262 = vrot.slane %v379, %v1261
        %v1263 = vlaneseq
        %v1264 = vshrl.u32 %v1263, 7
        %v1265 = vsub.s32 3, %v1264
        %v1266 = vrot.slane %v379, %v1265
        %v1267 = vlaneseq
        %v1268 = vshrl.u32 %v1267, 7
        %v1269 = vsub.s32 4, %v1268
        %v1270 = vrot.slane %v379, %v1269
        %v1271 = vlaneseq
        %v1272 = vshrl.u32 %v1271, 7
        %v1273 = vsub.s32 5, %v1272
        %v1274 = vrot.slane %v379, %v1273
        %v1275 = vlaneseq
        %v1276 = vshrl.u32 %v1275, 7
        %v1277 = vsub.s32 6, %v1276
        %v1278 = vrot.slane %v379, %v1277
        %v1279 = vlaneseq
        %v1280 = vshrl.u32 %v1279, 7
        %v1281 = vsub.s32 7, %v1280
        %v1282 = vrot.slane %v379, %v1281
        %vm1283 = vcmp.eq.s32.totalorder %v381, %v1158
        %vm1284 = vcmp.eq.s32.totalorder %v381, %v1162
        %vm1285 = vcmp.eq.s32.totalorder %v381, %v1166
        %vm1286 = vcmp.eq.s32.totalorder %v381, %v1170
        %vm1287 = vcmp.eq.s32.totalorder %v381, %v1174
        %vm1288 = vcmp.eq.s32.totalorder %v381, %v1178
        %vm1289 = vcmp.eq.s32.totalorder %v381, %v1182
        %vm1290 = vcmp.eq.s32.totalorder %v381, %v1186
        %vm1291 = vcmp.eq.s32.totalorder %v381, %v1190
        %vm1292 = vcmp.eq.s32.totalorder %v381, %v1194
        %vm1293 = vcmp.eq.s32.totalorder %v381, %v1198
        %vm1294 = vcmp.eq.s32.totalorder %v381, %v1202
        %vm1295 = vcmp.eq.s32.totalorder %v381, %v1206
        %vm1296 = vcmp.eq.s32.totalorder %v381, %v1210
        %vm1297 = vcmp.eq.s32.totalorder %v381, %v1214
        %vm1298 = vcmp.eq.s32.totalorder %v381, %v1218
        %vm1299 = vcmp.eq.s32.totalorder %v381, %v1222
        %vm1300 = vcmp.eq.s32.totalorder %v381, %v1226
        %vm1301 = vcmp.eq.s32.totalorder %v381, %v1230
        %vm1302 = vcmp.eq.s32.totalorder %v381, %v1234
        %vm1303 = vcmp.eq.s32.totalorder %v381, %v1238
        %vm1304 = vcmp.eq.s32.totalorder %v381, %v1242
        %vm1305 = vcmp.eq.s32.totalorder %v381, %v1246
        %vm1306 = vcmp.eq.s32.totalorder %v381, %v1250
        %vm1307 = vcmp.eq.s32.totalorder %v381, %v1254
        %vm1308 = vcmp.eq.s32.totalorder %v381, %v1258
        %vm1309 = vcmp.eq.s32.totalorder %v381, %v1262
        %vm1310 = vcmp.eq.s32.totalorder %v381, %v1266
        %vm1311 = vcmp.eq.s32.totalorder %v381, %v1270
        %vm1312 = vcmp.eq.s32.totalorder %v381, %v1274
        %vm1313 = vcmp.eq.s32.totalorder %v381, %v1278
        %vm1314 = vcmp.eq.s32.totalorder %v381, %v1282
        %v1315 = vld [vmem:[%s336] sm:$0xf]
        %v1332 = vcombine.high %v1139, %v1139
        %v1333 = vcombine.high %v1140, %v1140
        %v1334 = vcombine.high %v1141, %v1141
        %v1335 = vcombine.high %v1142, %v1142
        %v1336 = vcombine.high %v1143, %v1143
        %v1337 = vcombine.high %v1144, %v1144
        %v1338 = vcombine.high %v1145, %v1145
        %v1339 = vcombine.high %v1146, %v1146
        %v1340 = vcombine.high %v1147, %v1147
        %v1341 = vcombine.high %v1148, %v1148
        %v1342 = vcombine.high %v1149, %v1149
        %v1343 = vcombine.high %v1150, %v1150
        %v1344 = vcombine.high %v1151, %v1151
        %v1345 = vcombine.high %v1152, %v1152
        %v1346 = vcombine.high %v1153, %v1153
        %v1347 = vcombine.high %v1154, %v1154
        %v1364 = vsel %vm1283, %v1139, 0.0
        %v1365 = vsel %vm1284, %v1332, 0.0
        %v1366 = vsel %vm1285, %v1140, 0.0
        %v1367 = vsel %vm1286, %v1333, 0.0
        %v1368 = vsel %vm1287, %v1141, 0.0
        %v1369 = vsel %vm1288, %v1334, 0.0
        %v1370 = vsel %vm1289, %v1142, 0.0
        %v1371 = vsel %vm1290, %v1335, 0.0
        %v1372 = vsel %vm1291, %v1143, 0.0
        %v1373 = vsel %vm1292, %v1336, 0.0
        %v1374 = vsel %vm1293, %v1144, 0.0
        %v1375 = vsel %vm1294, %v1337, 0.0
        %v1376 = vsel %vm1295, %v1145, 0.0
        %v1377 = vsel %vm1296, %v1338, 0.0
        %v1378 = vsel %vm1297, %v1146, 0.0
        %v1379 = vsel %vm1298, %v1339, 0.0
        %v1380 = vsel %vm1299, %v1147, 0.0
        %v1381 = vsel %vm1300, %v1340, 0.0
        %v1382 = vsel %vm1301, %v1148, 0.0
        %v1383 = vsel %vm1302, %v1341, 0.0
        %v1384 = vsel %vm1303, %v1149, 0.0
        %v1385 = vsel %vm1304, %v1342, 0.0
        %v1386 = vsel %vm1305, %v1150, 0.0
        %v1387 = vsel %vm1306, %v1343, 0.0
        %v1388 = vsel %vm1307, %v1151, 0.0
        %v1389 = vsel %vm1308, %v1344, 0.0
        %v1390 = vsel %vm1309, %v1152, 0.0
        %v1391 = vsel %vm1310, %v1345, 0.0
        %v1392 = vsel %vm1311, %v1153, 0.0
        %v1393 = vsel %vm1312, %v1346, 0.0
        %v1394 = vsel %vm1313, %v1154, 0.0
        %v1395 = vsel %vm1314, %v1347, 0.0
        %v1396 = vsel %vm434, %v1364, 0.0
        %v1397 = vsel %vm434, %v1365, 0.0
        %v1398 = vadd.f32 %v1396, %v1397
        %v1399 = vsel %vm434, %v1366, 0.0
        %v1400 = vadd.f32 %v1398, %v1399
        %v1401 = vsel %vm434, %v1367, 0.0
        %v1402 = vadd.f32 %v1400, %v1401
        %v1403 = vsel %vm434, %v1368, 0.0
        %v1404 = vadd.f32 %v1402, %v1403
        %v1405 = vsel %vm434, %v1369, 0.0
        %v1406 = vadd.f32 %v1404, %v1405
        %v1407 = vsel %vm434, %v1370, 0.0
        %v1408 = vadd.f32 %v1406, %v1407
        %v1409 = vsel %vm434, %v1371, 0.0
        %v1410 = vadd.f32 %v1408, %v1409
        %v1411 = vsel %vm434, %v1372, 0.0
        %v1412 = vadd.f32 %v1410, %v1411
        %v1413 = vsel %vm434, %v1373, 0.0
        %v1414 = vadd.f32 %v1412, %v1413
        %v1415 = vsel %vm434, %v1374, 0.0
        %v1416 = vadd.f32 %v1414, %v1415
        %v1417 = vsel %vm434, %v1375, 0.0
        %v1418 = vadd.f32 %v1416, %v1417
        %v1419 = vsel %vm434, %v1376, 0.0
        %v1420 = vadd.f32 %v1418, %v1419
        %v1421 = vsel %vm434, %v1377, 0.0
        %v1422 = vadd.f32 %v1420, %v1421
        %v1423 = vsel %vm434, %v1378, 0.0
        %v1424 = vadd.f32 %v1422, %v1423
        %v1425 = vsel %vm434, %v1379, 0.0
        %v1426 = vadd.f32 %v1424, %v1425
        %v1427 = vsel %vm434, %v1380, 0.0
        %v1428 = vadd.f32 %v1426, %v1427
        %v1429 = vsel %vm434, %v1381, 0.0
        %v1430 = vadd.f32 %v1428, %v1429
        %v1431 = vsel %vm434, %v1382, 0.0
        %v1432 = vadd.f32 %v1430, %v1431
        %v1433 = vsel %vm434, %v1383, 0.0
        %v1434 = vadd.f32 %v1432, %v1433
        %v1435 = vsel %vm434, %v1384, 0.0
        %v1436 = vadd.f32 %v1434, %v1435
        %v1437 = vsel %vm434, %v1385, 0.0
        %v1438 = vadd.f32 %v1436, %v1437
        %v1439 = vsel %vm434, %v1386, 0.0
        %v1440 = vadd.f32 %v1438, %v1439
        %v1441 = vsel %vm434, %v1387, 0.0
        %v1442 = vadd.f32 %v1440, %v1441
        %v1443 = vsel %vm434, %v1388, 0.0
        %v1444 = vadd.f32 %v1442, %v1443
        %v1445 = vsel %vm434, %v1389, 0.0
        %v1446 = vadd.f32 %v1444, %v1445
        %v1447 = vsel %vm434, %v1390, 0.0
        %v1448 = vadd.f32 %v1446, %v1447
        %v1449 = vsel %vm434, %v1391, 0.0
        %v1450 = vadd.f32 %v1448, %v1449
        %v1451 = vsel %vm434, %v1392, 0.0
        %v1452 = vadd.f32 %v1450, %v1451
        %v1453 = vsel %vm434, %v1393, 0.0
        %v1454 = vadd.f32 %v1452, %v1453
        %v1455 = vsel %vm434, %v1394, 0.0
        %v1456 = vadd.f32 %v1454, %v1455
        %v1457 = vsel %vm434, %v1395, 0.0
        %v1458 = vadd.f32 %v1456, %v1457
        %1459 = vadd.xlane.f32.xlu0 %v1458
        %v1460 = vpop.xlane.xlu0 %1459
        %v1461 = vadd.f32 %v1315, %v1460
        %vm1462 = vcmask 3072
        %1463 = vst.msk [vmem:[%s336] sm:$0xf] %vm1462, %v1461
        %v1464 = vld [vmem:[%s343] sm:$0xf]
        %v1465 = vmul.f32 %v1139, %v1139
        %v1466 = vmul.f32 %v1140, %v1140
        %v1467 = vmul.f32 %v1141, %v1141
        %v1468 = vmul.f32 %v1142, %v1142
        %v1469 = vmul.f32 %v1143, %v1143
        %v1470 = vmul.f32 %v1144, %v1144
        %v1471 = vmul.f32 %v1145, %v1145
        %v1472 = vmul.f32 %v1146, %v1146
        %v1473 = vmul.f32 %v1147, %v1147
        %v1474 = vmul.f32 %v1148, %v1148
        %v1475 = vmul.f32 %v1149, %v1149
        %v1476 = vmul.f32 %v1150, %v1150
        %v1477 = vmul.f32 %v1151, %v1151
        %v1478 = vmul.f32 %v1152, %v1152
        %v1479 = vmul.f32 %v1153, %v1153
        %v1480 = vmul.f32 %v1154, %v1154
        %v1497 = vcombine.high %v1465, %v1465
        %v1498 = vcombine.high %v1466, %v1466
        %v1499 = vcombine.high %v1467, %v1467
        %v1500 = vcombine.high %v1468, %v1468
        %v1501 = vcombine.high %v1469, %v1469
        %v1502 = vcombine.high %v1470, %v1470
        %v1503 = vcombine.high %v1471, %v1471
        %v1504 = vcombine.high %v1472, %v1472
        %v1505 = vcombine.high %v1473, %v1473
        %v1506 = vcombine.high %v1474, %v1474
        %v1507 = vcombine.high %v1475, %v1475
        %v1508 = vcombine.high %v1476, %v1476
        %v1509 = vcombine.high %v1477, %v1477
        %v1510 = vcombine.high %v1478, %v1478
        %v1511 = vcombine.high %v1479, %v1479
        %v1512 = vcombine.high %v1480, %v1480
        %v1529 = vsel %vm434, %v1465, 0.0
        %v1530 = vsel %vm434, %v1497, 0.0
        %v1531 = vadd.f32 %v1529, %v1530
        %v1532 = vsel %vm434, %v1466, 0.0
        %v1533 = vadd.f32 %v1531, %v1532
        %v1534 = vsel %vm434, %v1498, 0.0
        %v1535 = vadd.f32 %v1533, %v1534
        %v1536 = vsel %vm434, %v1467, 0.0
        %v1537 = vadd.f32 %v1535, %v1536
        %v1538 = vsel %vm434, %v1499, 0.0
        %v1539 = vadd.f32 %v1537, %v1538
        %v1540 = vsel %vm434, %v1468, 0.0
        %v1541 = vadd.f32 %v1539, %v1540
        %v1542 = vsel %vm434, %v1500, 0.0
        %v1543 = vadd.f32 %v1541, %v1542
        %v1544 = vsel %vm434, %v1469, 0.0
        %v1545 = vadd.f32 %v1543, %v1544
        %v1546 = vsel %vm434, %v1501, 0.0
        %v1547 = vadd.f32 %v1545, %v1546
        %v1548 = vsel %vm434, %v1470, 0.0
        %v1549 = vadd.f32 %v1547, %v1548
        %v1550 = vsel %vm434, %v1502, 0.0
        %v1551 = vadd.f32 %v1549, %v1550
        %v1552 = vsel %vm434, %v1471, 0.0
        %v1553 = vadd.f32 %v1551, %v1552
        %v1554 = vsel %vm434, %v1503, 0.0
        %v1555 = vadd.f32 %v1553, %v1554
        %v1556 = vsel %vm434, %v1472, 0.0
        %v1557 = vadd.f32 %v1555, %v1556
        %v1558 = vsel %vm434, %v1504, 0.0
        %v1559 = vadd.f32 %v1557, %v1558
        %v1560 = vsel %vm434, %v1473, 0.0
        %v1561 = vadd.f32 %v1559, %v1560
        %v1562 = vsel %vm434, %v1505, 0.0
        %v1563 = vadd.f32 %v1561, %v1562
        %v1564 = vsel %vm434, %v1474, 0.0
        %v1565 = vadd.f32 %v1563, %v1564
        %v1566 = vsel %vm434, %v1506, 0.0
        %v1567 = vadd.f32 %v1565, %v1566
        %v1568 = vsel %vm434, %v1475, 0.0
        %v1569 = vadd.f32 %v1567, %v1568
        %v1570 = vsel %vm434, %v1507, 0.0
        %v1571 = vadd.f32 %v1569, %v1570
        %v1572 = vsel %vm434, %v1476, 0.0
        %v1573 = vadd.f32 %v1571, %v1572
        %v1574 = vsel %vm434, %v1508, 0.0
        %v1575 = vadd.f32 %v1573, %v1574
        %v1576 = vsel %vm434, %v1477, 0.0
        %v1577 = vadd.f32 %v1575, %v1576
        %v1578 = vsel %vm434, %v1509, 0.0
        %v1579 = vadd.f32 %v1577, %v1578
        %v1580 = vsel %vm434, %v1478, 0.0
        %v1581 = vadd.f32 %v1579, %v1580
        %v1582 = vsel %vm434, %v1510, 0.0
        %v1583 = vadd.f32 %v1581, %v1582
        %v1584 = vsel %vm434, %v1479, 0.0
        %v1585 = vadd.f32 %v1583, %v1584
        %v1586 = vsel %vm434, %v1511, 0.0
        %v1587 = vadd.f32 %v1585, %v1586
        %v1588 = vsel %vm434, %v1480, 0.0
        %v1589 = vadd.f32 %v1587, %v1588
        %v1590 = vsel %vm434, %v1512, 0.0
        %v1591 = vadd.f32 %v1589, %v1590
        %1592 = vadd.xlane.f32.xlu0 %v1591
        %v1593 = vpop.xlane.xlu0 %1592
        %v1594 = vadd.f32 %v1464, %v1593
        %1595 = vst.msk [vmem:[%s343] sm:$0xf] %vm1462, %v1594
        %v1596 = vld [vmem:[%s350] sm:$0xf]
        %v1597 = vsel %vm1283, 1.0, 0.0
        %v1598 = vsel %vm1284, 1.0, 0.0
        %v1599 = vsel %vm1285, 1.0, 0.0
        %v1600 = vsel %vm1286, 1.0, 0.0
        %v1601 = vsel %vm1287, 1.0, 0.0
        %v1602 = vsel %vm1288, 1.0, 0.0
        %v1603 = vsel %vm1289, 1.0, 0.0
        %v1604 = vsel %vm1290, 1.0, 0.0
        %v1605 = vsel %vm1291, 1.0, 0.0
        %v1606 = vsel %vm1292, 1.0, 0.0
        %v1607 = vsel %vm1293, 1.0, 0.0
        %v1608 = vsel %vm1294, 1.0, 0.0
        %v1609 = vsel %vm1295, 1.0, 0.0
        %v1610 = vsel %vm1296, 1.0, 0.0
        %v1611 = vsel %vm1297, 1.0, 0.0
        %v1612 = vsel %vm1298, 1.0, 0.0
        %v1613 = vsel %vm1299, 1.0, 0.0
        %v1614 = vsel %vm1300, 1.0, 0.0
        %v1615 = vsel %vm1301, 1.0, 0.0
        %v1616 = vsel %vm1302, 1.0, 0.0
        %v1617 = vsel %vm1303, 1.0, 0.0
        %v1618 = vsel %vm1304, 1.0, 0.0
        %v1619 = vsel %vm1305, 1.0, 0.0
        %v1620 = vsel %vm1306, 1.0, 0.0
        %v1621 = vsel %vm1307, 1.0, 0.0
        %v1622 = vsel %vm1308, 1.0, 0.0
        %v1623 = vsel %vm1309, 1.0, 0.0
        %v1624 = vsel %vm1310, 1.0, 0.0
        %v1625 = vsel %vm1311, 1.0, 0.0
        %v1626 = vsel %vm1312, 1.0, 0.0
        %v1627 = vsel %vm1313, 1.0, 0.0
        %v1628 = vsel %vm1314, 1.0, 0.0
        %v1629 = vsel %vm434, %v1597, 0.0
        %v1630 = vsel %vm434, %v1598, 0.0
        %v1631 = vadd.f32 %v1629, %v1630
        %v1632 = vsel %vm434, %v1599, 0.0
        %v1633 = vadd.f32 %v1631, %v1632
        %v1634 = vsel %vm434, %v1600, 0.0
        %v1635 = vadd.f32 %v1633, %v1634
        %v1636 = vsel %vm434, %v1601, 0.0
        %v1637 = vadd.f32 %v1635, %v1636
        %v1638 = vsel %vm434, %v1602, 0.0
        %v1639 = vadd.f32 %v1637, %v1638
        %v1640 = vsel %vm434, %v1603, 0.0
        %v1641 = vadd.f32 %v1639, %v1640
        %v1642 = vsel %vm434, %v1604, 0.0
        %v1643 = vadd.f32 %v1641, %v1642
        %v1644 = vsel %vm434, %v1605, 0.0
        %v1645 = vadd.f32 %v1643, %v1644
        %v1646 = vsel %vm434, %v1606, 0.0
        %v1647 = vadd.f32 %v1645, %v1646
        %v1648 = vsel %vm434, %v1607, 0.0
        %v1649 = vadd.f32 %v1647, %v1648
        %v1650 = vsel %vm434, %v1608, 0.0
        %v1651 = vadd.f32 %v1649, %v1650
        %v1652 = vsel %vm434, %v1609, 0.0
        %v1653 = vadd.f32 %v1651, %v1652
        %v1654 = vsel %vm434, %v1610, 0.0
        %v1655 = vadd.f32 %v1653, %v1654
        %v1656 = vsel %vm434, %v1611, 0.0
        %v1657 = vadd.f32 %v1655, %v1656
        %v1658 = vsel %vm434, %v1612, 0.0
        %v1659 = vadd.f32 %v1657, %v1658
        %v1660 = vsel %vm434, %v1613, 0.0
        %v1661 = vadd.f32 %v1659, %v1660
        %v1662 = vsel %vm434, %v1614, 0.0
        %v1663 = vadd.f32 %v1661, %v1662
        %v1664 = vsel %vm434, %v1615, 0.0
        %v1665 = vadd.f32 %v1663, %v1664
        %v1666 = vsel %vm434, %v1616, 0.0
        %v1667 = vadd.f32 %v1665, %v1666
        %v1668 = vsel %vm434, %v1617, 0.0
        %v1669 = vadd.f32 %v1667, %v1668
        %v1670 = vsel %vm434, %v1618, 0.0
        %v1671 = vadd.f32 %v1669, %v1670
        %v1672 = vsel %vm434, %v1619, 0.0
        %v1673 = vadd.f32 %v1671, %v1672
        %v1674 = vsel %vm434, %v1620, 0.0
        %v1675 = vadd.f32 %v1673, %v1674
        %v1676 = vsel %vm434, %v1621, 0.0
        %v1677 = vadd.f32 %v1675, %v1676
        %v1678 = vsel %vm434, %v1622, 0.0
        %v1679 = vadd.f32 %v1677, %v1678
        %v1680 = vsel %vm434, %v1623, 0.0
        %v1681 = vadd.f32 %v1679, %v1680
        %v1682 = vsel %vm434, %v1624, 0.0
        %v1683 = vadd.f32 %v1681, %v1682
        %v1684 = vsel %vm434, %v1625, 0.0
        %v1685 = vadd.f32 %v1683, %v1684
        %v1686 = vsel %vm434, %v1626, 0.0
        %v1687 = vadd.f32 %v1685, %v1686
        %v1688 = vsel %vm434, %v1627, 0.0
        %v1689 = vadd.f32 %v1687, %v1688
        %v1690 = vsel %vm434, %v1628, 0.0
        %v1691 = vadd.f32 %v1689, %v1690
        %1692 = vadd.xlane.f32.xlu0 %v1691
        %v1693 = vpop.xlane.xlu0 %1692
        %v1694 = vadd.f32 %v1596, %v1693
        %1695 = vst.msk [vmem:[%s350] sm:$0xf] %vm1462, %v1694
      $region36: #{dice_loss.1} parent=27 // pred_fallthru
        _
      %p1696 = scmp.ge.s32.totalorder %s351, 1
      // Predicated region
      $region37: #{dice_loss.1} parent=27 // pred_check
        %p1697 = pneg %p1696
      $region38: #{dice_loss.1} parent=27 // pred_check_branch
        %1699 = sbr.rel (%p1697) target = $region40
      $region39: #{dice_loss.1} parent=27 // pred_region
        %s1700 = smul.u32 %s351, 4096
        %s1701 = ssub.s32 4096, %s1700
        %v1702 = vlaneseq
        %v1703 = vand.u32 %v1702, 127
        %v1704 = vadd.s32 %v1703, 128
        %v1705 = vadd.s32 %v1703, 256
        %v1706 = vadd.s32 %v1703, 384
        %v1707 = vadd.s32 %v1703, 512
        %v1708 = vadd.s32 %v1703, 640
        %v1709 = vadd.s32 %v1703, 768
        %v1710 = vadd.s32 %v1703, 896
        %v1711 = vadd.s32 %v1703, 1024
        %v1712 = vadd.s32 %v1703, 1152
        %v1713 = vadd.s32 %v1703, 1280
        %v1714 = vadd.s32 %v1703, 1408
        %v1715 = vadd.s32 %v1703, 1536
        %v1716 = vadd.s32 %v1703, 1664
        %v1717 = vadd.s32 %v1703, 1792
        %v1718 = vadd.s32 %v1703, 1920
        %v1719 = vadd.s32 %v1703, 2048
        %v1720 = vadd.s32 %v1703, 2176
        %v1721 = vadd.s32 %v1703, 2304
        %v1722 = vadd.s32 %v1703, 2432
        %v1723 = vadd.s32 %v1703, 2560
        %v1724 = vadd.s32 %v1703, 2688
        %v1725 = vadd.s32 %v1703, 2816
        %v1726 = vadd.s32 %v1703, 2944
        %v1727 = vadd.s32 %v1703, 3072
        %v1728 = vadd.s32 %v1703, 3200
        %v1729 = vadd.s32 %v1703, 3328
        %v1730 = vadd.s32 %v1703, 3456
        %v1731 = vadd.s32 %v1703, 3584
        %v1732 = vadd.s32 %v1703, 3712
        %v1733 = vadd.s32 %v1703, 3840
        %v1734 = vadd.s32 %v1703, 3968
        %v1735 = vstv %s1701
        %vm1736 = vcmp.lt.s32.totalorder %v1703, %v1735
        %vm1737 = vcmp.lt.s32.totalorder %v1704, %v1735
        %vm1738 = vcmp.lt.s32.totalorder %v1705, %v1735
        %vm1739 = vcmp.lt.s32.totalorder %v1706, %v1735
        %vm1740 = vcmp.lt.s32.totalorder %v1707, %v1735
        %vm1741 = vcmp.lt.s32.totalorder %v1708, %v1735
        %vm1742 = vcmp.lt.s32.totalorder %v1709, %v1735
        %vm1743 = vcmp.lt.s32.totalorder %v1710, %v1735
        %vm1744 = vcmp.lt.s32.totalorder %v1711, %v1735
        %vm1745 = vcmp.lt.s32.totalorder %v1712, %v1735
        %vm1746 = vcmp.lt.s32.totalorder %v1713, %v1735
        %vm1747 = vcmp.lt.s32.totalorder %v1714, %v1735
        %vm1748 = vcmp.lt.s32.totalorder %v1715, %v1735
        %vm1749 = vcmp.lt.s32.totalorder %v1716, %v1735
        %vm1750 = vcmp.lt.s32.totalorder %v1717, %v1735
        %vm1751 = vcmp.lt.s32.totalorder %v1718, %v1735
        %vm1752 = vcmp.lt.s32.totalorder %v1719, %v1735
        %vm1753 = vcmp.lt.s32.totalorder %v1720, %v1735
        %vm1754 = vcmp.lt.s32.totalorder %v1721, %v1735
        %vm1755 = vcmp.lt.s32.totalorder %v1722, %v1735
        %vm1756 = vcmp.lt.s32.totalorder %v1723, %v1735
        %vm1757 = vcmp.lt.s32.totalorder %v1724, %v1735
        %vm1758 = vcmp.lt.s32.totalorder %v1725, %v1735
        %vm1759 = vcmp.lt.s32.totalorder %v1726, %v1735
        %vm1760 = vcmp.lt.s32.totalorder %v1727, %v1735
        %vm1761 = vcmp.lt.s32.totalorder %v1728, %v1735
        %vm1762 = vcmp.lt.s32.totalorder %v1729, %v1735
        %vm1763 = vcmp.lt.s32.totalorder %v1730, %v1735
        %vm1764 = vcmp.lt.s32.totalorder %v1731, %v1735
        %vm1765 = vcmp.lt.s32.totalorder %v1732, %v1735
        %vm1766 = vcmp.lt.s32.totalorder %v1733, %v1735
        %vm1767 = vcmp.lt.s32.totalorder %v1734, %v1735
        %v1768 = vsel %vm1736, 1, 0
        %v1769 = vsel %vm1737, 1, 0
        %v1770 = vsel %vm1738, 1, 0
        %v1771 = vsel %vm1739, 1, 0
        %v1772 = vsel %vm1740, 1, 0
        %v1773 = vsel %vm1741, 1, 0
        %v1774 = vsel %vm1742, 1, 0
        %v1775 = vsel %vm1743, 1, 0
        %v1776 = vsel %vm1744, 1, 0
        %v1777 = vsel %vm1745, 1, 0
        %v1778 = vsel %vm1746, 1, 0
        %v1779 = vsel %vm1747, 1, 0
        %v1780 = vsel %vm1748, 1, 0
        %v1781 = vsel %vm1749, 1, 0
        %v1782 = vsel %vm1750, 1, 0
        %v1783 = vsel %vm1751, 1, 0
        %v1784 = vsel %vm1752, 1, 0
        %v1785 = vsel %vm1753, 1, 0
        %v1786 = vsel %vm1754, 1, 0
        %v1787 = vsel %vm1755, 1, 0
        %v1788 = vsel %vm1756, 1, 0
        %v1789 = vsel %vm1757, 1, 0
        %v1790 = vsel %vm1758, 1, 0
        %v1791 = vsel %vm1759, 1, 0
        %v1792 = vsel %vm1760, 1, 0
        %v1793 = vsel %vm1761, 1, 0
        %v1794 = vsel %vm1762, 1, 0
        %v1795 = vsel %vm1763, 1, 0
        %v1796 = vsel %vm1764, 1, 0
        %v1797 = vsel %vm1765, 1, 0
        %v1798 = vsel %vm1766, 1, 0
        %v1799 = vsel %vm1767, 1, 0
        %vm1800 = vcmp.eq.s32.totalorder %v1768, 1
        %vm1801 = vcmp.eq.s32.totalorder %v1769, 1
        %vm1802 = vcmp.eq.s32.totalorder %v1770, 1
        %vm1803 = vcmp.eq.s32.totalorder %v1771, 1
        %vm1804 = vcmp.eq.s32.totalorder %v1772, 1
        %vm1805 = vcmp.eq.s32.totalorder %v1773, 1
        %vm1806 = vcmp.eq.s32.totalorder %v1774, 1
        %vm1807 = vcmp.eq.s32.totalorder %v1775, 1
        %vm1808 = vcmp.eq.s32.totalorder %v1776, 1
        %vm1809 = vcmp.eq.s32.totalorder %v1777, 1
        %vm1810 = vcmp.eq.s32.totalorder %v1778, 1
        %vm1811 = vcmp.eq.s32.totalorder %v1779, 1
        %vm1812 = vcmp.eq.s32.totalorder %v1780, 1
        %vm1813 = vcmp.eq.s32.totalorder %v1781, 1
        %vm1814 = vcmp.eq.s32.totalorder %v1782, 1
        %vm1815 = vcmp.eq.s32.totalorder %v1783, 1
        %vm1816 = vcmp.eq.s32.totalorder %v1784, 1
        %vm1817 = vcmp.eq.s32.totalorder %v1785, 1
        %vm1818 = vcmp.eq.s32.totalorder %v1786, 1
        %vm1819 = vcmp.eq.s32.totalorder %v1787, 1
        %vm1820 = vcmp.eq.s32.totalorder %v1788, 1
        %vm1821 = vcmp.eq.s32.totalorder %v1789, 1
        %vm1822 = vcmp.eq.s32.totalorder %v1790, 1
        %vm1823 = vcmp.eq.s32.totalorder %v1791, 1
        %vm1824 = vcmp.eq.s32.totalorder %v1792, 1
        %vm1825 = vcmp.eq.s32.totalorder %v1793, 1
        %vm1826 = vcmp.eq.s32.totalorder %v1794, 1
        %vm1827 = vcmp.eq.s32.totalorder %v1795, 1
        %vm1828 = vcmp.eq.s32.totalorder %v1796, 1
        %vm1829 = vcmp.eq.s32.totalorder %v1797, 1
        %vm1830 = vcmp.eq.s32.totalorder %v1798, 1
        %vm1831 = vcmp.eq.s32.totalorder %v1799, 1
        %v1848 = vcombine.high %v360, %v360
        %v1849 = vcombine.high %v361, %v361
        %v1850 = vcombine.high %v362, %v362
        %v1851 = vcombine.high %v363, %v363
        %v1852 = vcombine.high %v364, %v364
        %v1853 = vcombine.high %v365, %v365
        %v1854 = vcombine.high %v366, %v366
        %v1855 = vcombine.high %v367, %v367
        %v1856 = vcombine.high %v368, %v368
        %v1857 = vcombine.high %v369, %v369
        %v1858 = vcombine.high %v370, %v370
        %v1859 = vcombine.high %v371, %v371
        %v1860 = vcombine.high %v372, %v372
        %v1861 = vcombine.high %v373, %v373
        %v1862 = vcombine.high %v374, %v374
        %v1863 = vcombine.high %v375, %v375
        %v1880 = vsel %vm1800, %v360, 0.0
        %v1881 = vsel %vm1801, %v1848, 0.0
        %v1882 = vsel %vm1802, %v361, 0.0
        %v1883 = vsel %vm1803, %v1849, 0.0
        %v1884 = vsel %vm1804, %v362, 0.0
        %v1885 = vsel %vm1805, %v1850, 0.0
        %v1886 = vsel %vm1806, %v363, 0.0
        %v1887 = vsel %vm1807, %v1851, 0.0
        %v1888 = vsel %vm1808, %v364, 0.0
        %v1889 = vsel %vm1809, %v1852, 0.0
        %v1890 = vsel %vm1810, %v365, 0.0
        %v1891 = vsel %vm1811, %v1853, 0.0
        %v1892 = vsel %vm1812, %v366, 0.0
        %v1893 = vsel %vm1813, %v1854, 0.0
        %v1894 = vsel %vm1814, %v367, 0.0
        %v1895 = vsel %vm1815, %v1855, 0.0
        %v1896 = vsel %vm1816, %v368, 0.0
        %v1897 = vsel %vm1817, %v1856, 0.0
        %v1898 = vsel %vm1818, %v369, 0.0
        %v1899 = vsel %vm1819, %v1857, 0.0
        %v1900 = vsel %vm1820, %v370, 0.0
        %v1901 = vsel %vm1821, %v1858, 0.0
        %v1902 = vsel %vm1822, %v371, 0.0
        %v1903 = vsel %vm1823, %v1859, 0.0
        %v1904 = vsel %vm1824, %v372, 0.0
        %v1905 = vsel %vm1825, %v1860, 0.0
        %v1906 = vsel %vm1826, %v373, 0.0
        %v1907 = vsel %vm1827, %v1861, 0.0
        %v1908 = vsel %vm1828, %v374, 0.0
        %v1909 = vsel %vm1829, %v1862, 0.0
        %v1910 = vsel %vm1830, %v375, 0.0
        %v1911 = vsel %vm1831, %v1863, 0.0
        %vm1912 = vcmask 1043456
        %v1913 = vsel %vm1912, %v1880, -inf
        %v1914 = vrot.slane %v1913, 4
        %v1915 = vmax.f32 %v1913, %v1914
        %v1916 = vrot.slane %v1915, 2
        %v1917 = vmax.f32 %v1915, %v1916
        %v1918 = vrot.slane %v1917, 1
        %v1919 = vmax.f32 %v1917, %v1918
        %v1920 = vsel %vm1912, %v1881, -inf
        %v1921 = vrot.slane %v1920, 4
        %v1922 = vmax.f32 %v1920, %v1921
        %v1923 = vrot.slane %v1922, 2
        %v1924 = vmax.f32 %v1922, %v1923
        %v1925 = vrot.slane %v1924, 1
        %v1926 = vmax.f32 %v1924, %v1925
        %v1927 = vsel %vm1912, %v1882, -inf
        %v1928 = vrot.slane %v1927, 4
        %v1929 = vmax.f32 %v1927, %v1928
        %v1930 = vrot.slane %v1929, 2
        %v1931 = vmax.f32 %v1929, %v1930
        %v1932 = vrot.slane %v1931, 1
        %v1933 = vmax.f32 %v1931, %v1932
        %v1934 = vsel %vm1912, %v1883, -inf
        %v1935 = vrot.slane %v1934, 4
        %v1936 = vmax.f32 %v1934, %v1935
        %v1937 = vrot.slane %v1936, 2
        %v1938 = vmax.f32 %v1936, %v1937
        %v1939 = vrot.slane %v1938, 1
        %v1940 = vmax.f32 %v1938, %v1939
        %v1941 = vsel %vm1912, %v1884, -inf
        %v1942 = vrot.slane %v1941, 4
        %v1943 = vmax.f32 %v1941, %v1942
        %v1944 = vrot.slane %v1943, 2
        %v1945 = vmax.f32 %v1943, %v1944
        %v1946 = vrot.slane %v1945, 1
        %v1947 = vmax.f32 %v1945, %v1946
        %v1948 = vsel %vm1912, %v1885, -inf
        %v1949 = vrot.slane %v1948, 4
        %v1950 = vmax.f32 %v1948, %v1949
        %v1951 = vrot.slane %v1950, 2
        %v1952 = vmax.f32 %v1950, %v1951
        %v1953 = vrot.slane %v1952, 1
        %v1954 = vmax.f32 %v1952, %v1953
        %v1955 = vsel %vm1912, %v1886, -inf
        %v1956 = vrot.slane %v1955, 4
        %v1957 = vmax.f32 %v1955, %v1956
        %v1958 = vrot.slane %v1957, 2
        %v1959 = vmax.f32 %v1957, %v1958
        %v1960 = vrot.slane %v1959, 1
        %v1961 = vmax.f32 %v1959, %v1960
        %v1962 = vsel %vm1912, %v1887, -inf
        %v1963 = vrot.slane %v1962, 4
        %v1964 = vmax.f32 %v1962, %v1963
        %v1965 = vrot.slane %v1964, 2
        %v1966 = vmax.f32 %v1964, %v1965
        %v1967 = vrot.slane %v1966, 1
        %v1968 = vmax.f32 %v1966, %v1967
        %v1969 = vsel %vm1912, %v1888, -inf
        %v1970 = vrot.slane %v1969, 4
        %v1971 = vmax.f32 %v1969, %v1970
        %v1972 = vrot.slane %v1971, 2
        %v1973 = vmax.f32 %v1971, %v1972
        %v1974 = vrot.slane %v1973, 1
        %v1975 = vmax.f32 %v1973, %v1974
        %v1976 = vsel %vm1912, %v1889, -inf
        %v1977 = vrot.slane %v1976, 4
        %v1978 = vmax.f32 %v1976, %v1977
        %v1979 = vrot.slane %v1978, 2
        %v1980 = vmax.f32 %v1978, %v1979
        %v1981 = vrot.slane %v1980, 1
        %v1982 = vmax.f32 %v1980, %v1981
        %v1983 = vsel %vm1912, %v1890, -inf
        %v1984 = vrot.slane %v1983, 4
        %v1985 = vmax.f32 %v1983, %v1984
        %v1986 = vrot.slane %v1985, 2
        %v1987 = vmax.f32 %v1985, %v1986
        %v1988 = vrot.slane %v1987, 1
        %v1989 = vmax.f32 %v1987, %v1988
        %v1990 = vsel %vm1912, %v1891, -inf
        %v1991 = vrot.slane %v1990, 4
        %v1992 = vmax.f32 %v1990, %v1991
        %v1993 = vrot.slane %v1992, 2
        %v1994 = vmax.f32 %v1992, %v1993
        %v1995 = vrot.slane %v1994, 1
        %v1996 = vmax.f32 %v1994, %v1995
        %v1997 = vsel %vm1912, %v1892, -inf
        %v1998 = vrot.slane %v1997, 4
        %v1999 = vmax.f32 %v1997, %v1998
        %v2000 = vrot.slane %v1999, 2
        %v2001 = vmax.f32 %v1999, %v2000
        %v2002 = vrot.slane %v2001, 1
        %v2003 = vmax.f32 %v2001, %v2002
        %v2004 = vsel %vm1912, %v1893, -inf
        %v2005 = vrot.slane %v2004, 4
        %v2006 = vmax.f32 %v2004, %v2005
        %v2007 = vrot.slane %v2006, 2
        %v2008 = vmax.f32 %v2006, %v2007
        %v2009 = vrot.slane %v2008, 1
        %v2010 = vmax.f32 %v2008, %v2009
        %v2011 = vsel %vm1912, %v1894, -inf
        %v2012 = vrot.slane %v2011, 4
        %v2013 = vmax.f32 %v2011, %v2012
        %v2014 = vrot.slane %v2013, 2
        %v2015 = vmax.f32 %v2013, %v2014
        %v2016 = vrot.slane %v2015, 1
        %v2017 = vmax.f32 %v2015, %v2016
        %v2018 = vsel %vm1912, %v1895, -inf
        %v2019 = vrot.slane %v2018, 4
        %v2020 = vmax.f32 %v2018, %v2019
        %v2021 = vrot.slane %v2020, 2
        %v2022 = vmax.f32 %v2020, %v2021
        %v2023 = vrot.slane %v2022, 1
        %v2024 = vmax.f32 %v2022, %v2023
        %v2025 = vsel %vm1912, %v1896, -inf
        %v2026 = vrot.slane %v2025, 4
        %v2027 = vmax.f32 %v2025, %v2026
        %v2028 = vrot.slane %v2027, 2
        %v2029 = vmax.f32 %v2027, %v2028
        %v2030 = vrot.slane %v2029, 1
        %v2031 = vmax.f32 %v2029, %v2030
        %v2032 = vsel %vm1912, %v1897, -inf
        %v2033 = vrot.slane %v2032, 4
        %v2034 = vmax.f32 %v2032, %v2033
        %v2035 = vrot.slane %v2034, 2
        %v2036 = vmax.f32 %v2034, %v2035
        %v2037 = vrot.slane %v2036, 1
        %v2038 = vmax.f32 %v2036, %v2037
        %v2039 = vsel %vm1912, %v1898, -inf
        %v2040 = vrot.slane %v2039, 4
        %v2041 = vmax.f32 %v2039, %v2040
        %v2042 = vrot.slane %v2041, 2
        %v2043 = vmax.f32 %v2041, %v2042
        %v2044 = vrot.slane %v2043, 1
        %v2045 = vmax.f32 %v2043, %v2044
        %v2046 = vsel %vm1912, %v1899, -inf
        %v2047 = vrot.slane %v2046, 4
        %v2048 = vmax.f32 %v2046, %v2047
        %v2049 = vrot.slane %v2048, 2
        %v2050 = vmax.f32 %v2048, %v2049
        %v2051 = vrot.slane %v2050, 1
        %v2052 = vmax.f32 %v2050, %v2051
        %v2053 = vsel %vm1912, %v1900, -inf
        %v2054 = vrot.slane %v2053, 4
        %v2055 = vmax.f32 %v2053, %v2054
        %v2056 = vrot.slane %v2055, 2
        %v2057 = vmax.f32 %v2055, %v2056
        %v2058 = vrot.slane %v2057, 1
        %v2059 = vmax.f32 %v2057, %v2058
        %v2060 = vsel %vm1912, %v1901, -inf
        %v2061 = vrot.slane %v2060, 4
        %v2062 = vmax.f32 %v2060, %v2061
        %v2063 = vrot.slane %v2062, 2
        %v2064 = vmax.f32 %v2062, %v2063
        %v2065 = vrot.slane %v2064, 1
        %v2066 = vmax.f32 %v2064, %v2065
        %v2067 = vsel %vm1912, %v1902, -inf
        %v2068 = vrot.slane %v2067, 4
        %v2069 = vmax.f32 %v2067, %v2068
        %v2070 = vrot.slane %v2069, 2
        %v2071 = vmax.f32 %v2069, %v2070
        %v2072 = vrot.slane %v2071, 1
        %v2073 = vmax.f32 %v2071, %v2072
        %v2074 = vsel %vm1912, %v1903, -inf
        %v2075 = vrot.slane %v2074, 4
        %v2076 = vmax.f32 %v2074, %v2075
        %v2077 = vrot.slane %v2076, 2
        %v2078 = vmax.f32 %v2076, %v2077
        %v2079 = vrot.slane %v2078, 1
        %v2080 = vmax.f32 %v2078, %v2079
        %v2081 = vsel %vm1912, %v1904, -inf
        %v2082 = vrot.slane %v2081, 4
        %v2083 = vmax.f32 %v2081, %v2082
        %v2084 = vrot.slane %v2083, 2
        %v2085 = vmax.f32 %v2083, %v2084
        %v2086 = vrot.slane %v2085, 1
        %v2087 = vmax.f32 %v2085, %v2086
        %v2088 = vsel %vm1912, %v1905, -inf
        %v2089 = vrot.slane %v2088, 4
        %v2090 = vmax.f32 %v2088, %v2089
        %v2091 = vrot.slane %v2090, 2
        %v2092 = vmax.f32 %v2090, %v2091
        %v2093 = vrot.slane %v2092, 1
        %v2094 = vmax.f32 %v2092, %v2093
        %v2095 = vsel %vm1912, %v1906, -inf
        %v2096 = vrot.slane %v2095, 4
        %v2097 = vmax.f32 %v2095, %v2096
        %v2098 = vrot.slane %v2097, 2
        %v2099 = vmax.f32 %v2097, %v2098
        %v2100 = vrot.slane %v2099, 1
        %v2101 = vmax.f32 %v2099, %v2100
        %v2102 = vsel %vm1912, %v1907, -inf
        %v2103 = vrot.slane %v2102, 4
        %v2104 = vmax.f32 %v2102, %v2103
        %v2105 = vrot.slane %v2104, 2
        %v2106 = vmax.f32 %v2104, %v2105
        %v2107 = vrot.slane %v2106, 1
        %v2108 = vmax.f32 %v2106, %v2107
        %v2109 = vsel %vm1912, %v1908, -inf
        %v2110 = vrot.slane %v2109, 4
        %v2111 = vmax.f32 %v2109, %v2110
        %v2112 = vrot.slane %v2111, 2
        %v2113 = vmax.f32 %v2111, %v2112
        %v2114 = vrot.slane %v2113, 1
        %v2115 = vmax.f32 %v2113, %v2114
        %v2116 = vsel %vm1912, %v1909, -inf
        %v2117 = vrot.slane %v2116, 4
        %v2118 = vmax.f32 %v2116, %v2117
        %v2119 = vrot.slane %v2118, 2
        %v2120 = vmax.f32 %v2118, %v2119
        %v2121 = vrot.slane %v2120, 1
        %v2122 = vmax.f32 %v2120, %v2121
        %v2123 = vsel %vm1912, %v1910, -inf
        %v2124 = vrot.slane %v2123, 4
        %v2125 = vmax.f32 %v2123, %v2124
        %v2126 = vrot.slane %v2125, 2
        %v2127 = vmax.f32 %v2125, %v2126
        %v2128 = vrot.slane %v2127, 1
        %v2129 = vmax.f32 %v2127, %v2128
        %v2130 = vsel %vm1912, %v1911, -inf
        %v2131 = vrot.slane %v2130, 4
        %v2132 = vmax.f32 %v2130, %v2131
        %v2133 = vrot.slane %v2132, 2
        %v2134 = vmax.f32 %v2132, %v2133
        %v2135 = vrot.slane %v2134, 1
        %v2136 = vmax.f32 %v2134, %v2135
        %v2137 = vsub.f32 %v1880, %v1919
        %v2138 = vsub.f32 %v1881, %v1926
        %v2139 = vsub.f32 %v1882, %v1933
        %v2140 = vsub.f32 %v1883, %v1940
        %v2141 = vsub.f32 %v1884, %v1947
        %v2142 = vsub.f32 %v1885, %v1954
        %v2143 = vsub.f32 %v1886, %v1961
        %v2144 = vsub.f32 %v1887, %v1968
        %v2145 = vsub.f32 %v1888, %v1975
        %v2146 = vsub.f32 %v1889, %v1982
        %v2147 = vsub.f32 %v1890, %v1989
        %v2148 = vsub.f32 %v1891, %v1996
        %v2149 = vsub.f32 %v1892, %v2003
        %v2150 = vsub.f32 %v1893, %v2010
        %v2151 = vsub.f32 %v1894, %v2017
        %v2152 = vsub.f32 %v1895, %v2024
        %v2153 = vsub.f32 %v1896, %v2031
        %v2154 = vsub.f32 %v1897, %v2038
        %v2155 = vsub.f32 %v1898, %v2045
        %v2156 = vsub.f32 %v1899, %v2052
        %v2157 = vsub.f32 %v1900, %v2059
        %v2158 = vsub.f32 %v1901, %v2066
        %v2159 = vsub.f32 %v1902, %v2073
        %v2160 = vsub.f32 %v1903, %v2080
        %v2161 = vsub.f32 %v1904, %v2087
        %v2162 = vsub.f32 %v1905, %v2094
        %v2163 = vsub.f32 %v1906, %v2101
        %v2164 = vsub.f32 %v1907, %v2108
        %v2165 = vsub.f32 %v1908, %v2115
        %v2166 = vsub.f32 %v1909, %v2122
        %v2167 = vsub.f32 %v1910, %v2129
        %v2168 = vsub.f32 %v1911, %v2136
        %v2169 = vmul.f32 %v2137, 1.442695
        %v2170 = vpow.pop %v2169
        %v2171 = vmul.f32 %v2138, 1.442695
        %v2172 = vpow.pop %v2171
        %v2173 = vmul.f32 %v2139, 1.442695
        %v2174 = vpow.pop %v2173
        %v2175 = vmul.f32 %v2140, 1.442695
        %v2176 = vpow.pop %v2175
        %v2177 = vmul.f32 %v2141, 1.442695
        %v2178 = vpow.pop %v2177
        %v2179 = vmul.f32 %v2142, 1.442695
        %v2180 = vpow.pop %v2179
        %v2181 = vmul.f32 %v2143, 1.442695
        %v2182 = vpow.pop %v2181
        %v2183 = vmul.f32 %v2144, 1.442695
        %v2184 = vpow.pop %v2183
        %v2185 = vmul.f32 %v2145, 1.442695
        %v2186 = vpow.pop %v2185
        %v2187 = vmul.f32 %v2146, 1.442695
        %v2188 = vpow.pop %v2187
        %v2189 = vmul.f32 %v2147, 1.442695
        %v2190 = vpow.pop %v2189
        %v2191 = vmul.f32 %v2148, 1.442695
        %v2192 = vpow.pop %v2191
        %v2193 = vmul.f32 %v2149, 1.442695
        %v2194 = vpow.pop %v2193
        %v2195 = vmul.f32 %v2150, 1.442695
        %v2196 = vpow.pop %v2195
        %v2197 = vmul.f32 %v2151, 1.442695
        %v2198 = vpow.pop %v2197
        %v2199 = vmul.f32 %v2152, 1.442695
        %v2200 = vpow.pop %v2199
        %v2201 = vmul.f32 %v2153, 1.442695
        %v2202 = vpow.pop %v2201
        %v2203 = vmul.f32 %v2154, 1.442695
        %v2204 = vpow.pop %v2203
        %v2205 = vmul.f32 %v2155, 1.442695
        %v2206 = vpow.pop %v2205
        %v2207 = vmul.f32 %v2156, 1.442695
        %v2208 = vpow.pop %v2207
        %v2209 = vmul.f32 %v2157, 1.442695
        %v2210 = vpow.pop %v2209
        %v2211 = vmul.f32 %v2158, 1.442695
        %v2212 = vpow.pop %v2211
        %v2213 = vmul.f32 %v2159, 1.442695
        %v2214 = vpow.pop %v2213
        %v2215 = vmul.f32 %v2160, 1.442695
        %v2216 = vpow.pop %v2215
        %v2217 = vmul.f32 %v2161, 1.442695
        %v2218 = vpow.pop %v2217
        %v2219 = vmul.f32 %v2162, 1.442695
        %v2220 = vpow.pop %v2219
        %v2221 = vmul.f32 %v2163, 1.442695
        %v2222 = vpow.pop %v2221
        %v2223 = vmul.f32 %v2164, 1.442695
        %v2224 = vpow.pop %v2223
        %v2225 = vmul.f32 %v2165, 1.442695
        %v2226 = vpow.pop %v2225
        %v2227 = vmul.f32 %v2166, 1.442695
        %v2228 = vpow.pop %v2227
        %v2229 = vmul.f32 %v2167, 1.442695
        %v2230 = vpow.pop %v2229
        %v2231 = vmul.f32 %v2168, 1.442695
        %v2232 = vpow.pop %v2231
        %v2233 = vsel %vm1912, %v2170, 0.0
        %v2234 = vrot.slane %v2233, 4
        %v2235 = vadd.f32 %v2233, %v2234
        %v2236 = vrot.slane %v2235, 2
        %v2237 = vadd.f32 %v2235, %v2236
        %v2238 = vrot.slane %v2237, 1
        %v2239 = vadd.f32 %v2237, %v2238
        %v2240 = vsel %vm1912, %v2172, 0.0
        %v2241 = vrot.slane %v2240, 4
        %v2242 = vadd.f32 %v2240, %v2241
        %v2243 = vrot.slane %v2242, 2
        %v2244 = vadd.f32 %v2242, %v2243
        %v2245 = vrot.slane %v2244, 1
        %v2246 = vadd.f32 %v2244, %v2245
        %v2247 = vsel %vm1912, %v2174, 0.0
        %v2248 = vrot.slane %v2247, 4
        %v2249 = vadd.f32 %v2247, %v2248
        %v2250 = vrot.slane %v2249, 2
        %v2251 = vadd.f32 %v2249, %v2250
        %v2252 = vrot.slane %v2251, 1
        %v2253 = vadd.f32 %v2251, %v2252
        %v2254 = vsel %vm1912, %v2176, 0.0
        %v2255 = vrot.slane %v2254, 4
        %v2256 = vadd.f32 %v2254, %v2255
        %v2257 = vrot.slane %v2256, 2
        %v2258 = vadd.f32 %v2256, %v2257
        %v2259 = vrot.slane %v2258, 1
        %v2260 = vadd.f32 %v2258, %v2259
        %v2261 = vsel %vm1912, %v2178, 0.0
        %v2262 = vrot.slane %v2261, 4
        %v2263 = vadd.f32 %v2261, %v2262
        %v2264 = vrot.slane %v2263, 2
        %v2265 = vadd.f32 %v2263, %v2264
        %v2266 = vrot.slane %v2265, 1
        %v2267 = vadd.f32 %v2265, %v2266
        %v2268 = vsel %vm1912, %v2180, 0.0
        %v2269 = vrot.slane %v2268, 4
        %v2270 = vadd.f32 %v2268, %v2269
        %v2271 = vrot.slane %v2270, 2
        %v2272 = vadd.f32 %v2270, %v2271
        %v2273 = vrot.slane %v2272, 1
        %v2274 = vadd.f32 %v2272, %v2273
        %v2275 = vsel %vm1912, %v2182, 0.0
        %v2276 = vrot.slane %v2275, 4
        %v2277 = vadd.f32 %v2275, %v2276
        %v2278 = vrot.slane %v2277, 2
        %v2279 = vadd.f32 %v2277, %v2278
        %v2280 = vrot.slane %v2279, 1
        %v2281 = vadd.f32 %v2279, %v2280
        %v2282 = vsel %vm1912, %v2184, 0.0
        %v2283 = vrot.slane %v2282, 4
        %v2284 = vadd.f32 %v2282, %v2283
        %v2285 = vrot.slane %v2284, 2
        %v2286 = vadd.f32 %v2284, %v2285
        %v2287 = vrot.slane %v2286, 1
        %v2288 = vadd.f32 %v2286, %v2287
        %v2289 = vsel %vm1912, %v2186, 0.0
        %v2290 = vrot.slane %v2289, 4
        %v2291 = vadd.f32 %v2289, %v2290
        %v2292 = vrot.slane %v2291, 2
        %v2293 = vadd.f32 %v2291, %v2292
        %v2294 = vrot.slane %v2293, 1
        %v2295 = vadd.f32 %v2293, %v2294
        %v2296 = vsel %vm1912, %v2188, 0.0
        %v2297 = vrot.slane %v2296, 4
        %v2298 = vadd.f32 %v2296, %v2297
        %v2299 = vrot.slane %v2298, 2
        %v2300 = vadd.f32 %v2298, %v2299
        %v2301 = vrot.slane %v2300, 1
        %v2302 = vadd.f32 %v2300, %v2301
        %v2303 = vsel %vm1912, %v2190, 0.0
        %v2304 = vrot.slane %v2303, 4
        %v2305 = vadd.f32 %v2303, %v2304
        %v2306 = vrot.slane %v2305, 2
        %v2307 = vadd.f32 %v2305, %v2306
        %v2308 = vrot.slane %v2307, 1
        %v2309 = vadd.f32 %v2307, %v2308
        %v2310 = vsel %vm1912, %v2192, 0.0
        %v2311 = vrot.slane %v2310, 4
        %v2312 = vadd.f32 %v2310, %v2311
        %v2313 = vrot.slane %v2312, 2
        %v2314 = vadd.f32 %v2312, %v2313
        %v2315 = vrot.slane %v2314, 1
        %v2316 = vadd.f32 %v2314, %v2315
        %v2317 = vsel %vm1912, %v2194, 0.0
        %v2318 = vrot.slane %v2317, 4
        %v2319 = vadd.f32 %v2317, %v2318
        %v2320 = vrot.slane %v2319, 2
        %v2321 = vadd.f32 %v2319, %v2320
        %v2322 = vrot.slane %v2321, 1
        %v2323 = vadd.f32 %v2321, %v2322
        %v2324 = vsel %vm1912, %v2196, 0.0
        %v2325 = vrot.slane %v2324, 4
        %v2326 = vadd.f32 %v2324, %v2325
        %v2327 = vrot.slane %v2326, 2
        %v2328 = vadd.f32 %v2326, %v2327
        %v2329 = vrot.slane %v2328, 1
        %v2330 = vadd.f32 %v2328, %v2329
        %v2331 = vsel %vm1912, %v2198, 0.0
        %v2332 = vrot.slane %v2331, 4
        %v2333 = vadd.f32 %v2331, %v2332
        %v2334 = vrot.slane %v2333, 2
        %v2335 = vadd.f32 %v2333, %v2334
        %v2336 = vrot.slane %v2335, 1
        %v2337 = vadd.f32 %v2335, %v2336
        %v2338 = vsel %vm1912, %v2200, 0.0
        %v2339 = vrot.slane %v2338, 4
        %v2340 = vadd.f32 %v2338, %v2339
        %v2341 = vrot.slane %v2340, 2
        %v2342 = vadd.f32 %v2340, %v2341
        %v2343 = vrot.slane %v2342, 1
        %v2344 = vadd.f32 %v2342, %v2343
        %v2345 = vsel %vm1912, %v2202, 0.0
        %v2346 = vrot.slane %v2345, 4
        %v2347 = vadd.f32 %v2345, %v2346
        %v2348 = vrot.slane %v2347, 2
        %v2349 = vadd.f32 %v2347, %v2348
        %v2350 = vrot.slane %v2349, 1
        %v2351 = vadd.f32 %v2349, %v2350
        %v2352 = vsel %vm1912, %v2204, 0.0
        %v2353 = vrot.slane %v2352, 4
        %v2354 = vadd.f32 %v2352, %v2353
        %v2355 = vrot.slane %v2354, 2
        %v2356 = vadd.f32 %v2354, %v2355
        %v2357 = vrot.slane %v2356, 1
        %v2358 = vadd.f32 %v2356, %v2357
        %v2359 = vsel %vm1912, %v2206, 0.0
        %v2360 = vrot.slane %v2359, 4
        %v2361 = vadd.f32 %v2359, %v2360
        %v2362 = vrot.slane %v2361, 2
        %v2363 = vadd.f32 %v2361, %v2362
        %v2364 = vrot.slane %v2363, 1
        %v2365 = vadd.f32 %v2363, %v2364
        %v2366 = vsel %vm1912, %v2208, 0.0
        %v2367 = vrot.slane %v2366, 4
        %v2368 = vadd.f32 %v2366, %v2367
        %v2369 = vrot.slane %v2368, 2
        %v2370 = vadd.f32 %v2368, %v2369
        %v2371 = vrot.slane %v2370, 1
        %v2372 = vadd.f32 %v2370, %v2371
        %v2373 = vsel %vm1912, %v2210, 0.0
        %v2374 = vrot.slane %v2373, 4
        %v2375 = vadd.f32 %v2373, %v2374
        %v2376 = vrot.slane %v2375, 2
        %v2377 = vadd.f32 %v2375, %v2376
        %v2378 = vrot.slane %v2377, 1
        %v2379 = vadd.f32 %v2377, %v2378
        %v2380 = vsel %vm1912, %v2212, 0.0
        %v2381 = vrot.slane %v2380, 4
        %v2382 = vadd.f32 %v2380, %v2381
        %v2383 = vrot.slane %v2382, 2
        %v2384 = vadd.f32 %v2382, %v2383
        %v2385 = vrot.slane %v2384, 1
        %v2386 = vadd.f32 %v2384, %v2385
        %v2387 = vsel %vm1912, %v2214, 0.0
        %v2388 = vrot.slane %v2387, 4
        %v2389 = vadd.f32 %v2387, %v2388
        %v2390 = vrot.slane %v2389, 2
        %v2391 = vadd.f32 %v2389, %v2390
        %v2392 = vrot.slane %v2391, 1
        %v2393 = vadd.f32 %v2391, %v2392
        %v2394 = vsel %vm1912, %v2216, 0.0
        %v2395 = vrot.slane %v2394, 4
        %v2396 = vadd.f32 %v2394, %v2395
        %v2397 = vrot.slane %v2396, 2
        %v2398 = vadd.f32 %v2396, %v2397
        %v2399 = vrot.slane %v2398, 1
        %v2400 = vadd.f32 %v2398, %v2399
        %v2401 = vsel %vm1912, %v2218, 0.0
        %v2402 = vrot.slane %v2401, 4
        %v2403 = vadd.f32 %v2401, %v2402
        %v2404 = vrot.slane %v2403, 2
        %v2405 = vadd.f32 %v2403, %v2404
        %v2406 = vrot.slane %v2405, 1
        %v2407 = vadd.f32 %v2405, %v2406
        %v2408 = vsel %vm1912, %v2220, 0.0
        %v2409 = vrot.slane %v2408, 4
        %v2410 = vadd.f32 %v2408, %v2409
        %v2411 = vrot.slane %v2410, 2
        %v2412 = vadd.f32 %v2410, %v2411
        %v2413 = vrot.slane %v2412, 1
        %v2414 = vadd.f32 %v2412, %v2413
        %v2415 = vsel %vm1912, %v2222, 0.0
        %v2416 = vrot.slane %v2415, 4
        %v2417 = vadd.f32 %v2415, %v2416
        %v2418 = vrot.slane %v2417, 2
        %v2419 = vadd.f32 %v2417, %v2418
        %v2420 = vrot.slane %v2419, 1
        %v2421 = vadd.f32 %v2419, %v2420
        %v2422 = vsel %vm1912, %v2224, 0.0
        %v2423 = vrot.slane %v2422, 4
        %v2424 = vadd.f32 %v2422, %v2423
        %v2425 = vrot.slane %v2424, 2
        %v2426 = vadd.f32 %v2424, %v2425
        %v2427 = vrot.slane %v2426, 1
        %v2428 = vadd.f32 %v2426, %v2427
        %v2429 = vsel %vm1912, %v2226, 0.0
        %v2430 = vrot.slane %v2429, 4
        %v2431 = vadd.f32 %v2429, %v2430
        %v2432 = vrot.slane %v2431, 2
        %v2433 = vadd.f32 %v2431, %v2432
        %v2434 = vrot.slane %v2433, 1
        %v2435 = vadd.f32 %v2433, %v2434
        %v2436 = vsel %vm1912, %v2228, 0.0
        %v2437 = vrot.slane %v2436, 4
        %v2438 = vadd.f32 %v2436, %v2437
        %v2439 = vrot.slane %v2438, 2
        %v2440 = vadd.f32 %v2438, %v2439
        %v2441 = vrot.slane %v2440, 1
        %v2442 = vadd.f32 %v2440, %v2441
        %v2443 = vsel %vm1912, %v2230, 0.0
        %v2444 = vrot.slane %v2443, 4
        %v2445 = vadd.f32 %v2443, %v2444
        %v2446 = vrot.slane %v2445, 2
        %v2447 = vadd.f32 %v2445, %v2446
        %v2448 = vrot.slane %v2447, 1
        %v2449 = vadd.f32 %v2447, %v2448
        %v2450 = vsel %vm1912, %v2232, 0.0
        %v2451 = vrot.slane %v2450, 4
        %v2452 = vadd.f32 %v2450, %v2451
        %v2453 = vrot.slane %v2452, 2
        %v2454 = vadd.f32 %v2452, %v2453
        %v2455 = vrot.slane %v2454, 1
        %v2456 = vadd.f32 %v2454, %v2455
        %v2457 = vrcp.pop %v2239
        %v2458 = vrcp.pop %v2246
        %v2459 = vrcp.pop %v2253
        %v2460 = vrcp.pop %v2260
        %v2461 = vrcp.pop %v2267
        %v2462 = vrcp.pop %v2274
        %v2463 = vrcp.pop %v2281
        %v2464 = vrcp.pop %v2288
        %v2465 = vrcp.pop %v2295
        %v2466 = vrcp.pop %v2302
        %v2467 = vrcp.pop %v2309
        %v2468 = vrcp.pop %v2316
        %v2469 = vrcp.pop %v2323
        %v2470 = vrcp.pop %v2330
        %v2471 = vrcp.pop %v2337
        %v2472 = vrcp.pop %v2344
        %v2473 = vrcp.pop %v2351
        %v2474 = vrcp.pop %v2358
        %v2475 = vrcp.pop %v2365
        %v2476 = vrcp.pop %v2372
        %v2477 = vrcp.pop %v2379
        %v2478 = vrcp.pop %v2386
        %v2479 = vrcp.pop %v2393
        %v2480 = vrcp.pop %v2400
        %v2481 = vrcp.pop %v2407
        %v2482 = vrcp.pop %v2414
        %v2483 = vrcp.pop %v2421
        %v2484 = vrcp.pop %v2428
        %v2485 = vrcp.pop %v2435
        %v2486 = vrcp.pop %v2442
        %v2487 = vrcp.pop %v2449
        %v2488 = vrcp.pop %v2456
        %v2489 = vmul.f32 %v2170, %v2457
        %v2490 = vmul.f32 %v2172, %v2458
        %v2491 = vmul.f32 %v2174, %v2459
        %v2492 = vmul.f32 %v2176, %v2460
        %v2493 = vmul.f32 %v2178, %v2461
        %v2494 = vmul.f32 %v2180, %v2462
        %v2495 = vmul.f32 %v2182, %v2463
        %v2496 = vmul.f32 %v2184, %v2464
        %v2497 = vmul.f32 %v2186, %v2465
        %v2498 = vmul.f32 %v2188, %v2466
        %v2499 = vmul.f32 %v2190, %v2467
        %v2500 = vmul.f32 %v2192, %v2468
        %v2501 = vmul.f32 %v2194, %v2469
        %v2502 = vmul.f32 %v2196, %v2470
        %v2503 = vmul.f32 %v2198, %v2471
        %v2504 = vmul.f32 %v2200, %v2472
        %v2505 = vmul.f32 %v2202, %v2473
        %v2506 = vmul.f32 %v2204, %v2474
        %v2507 = vmul.f32 %v2206, %v2475
        %v2508 = vmul.f32 %v2208, %v2476
        %v2509 = vmul.f32 %v2210, %v2477
        %v2510 = vmul.f32 %v2212, %v2478
        %v2511 = vmul.f32 %v2214, %v2479
        %v2512 = vmul.f32 %v2216, %v2480
        %v2513 = vmul.f32 %v2218, %v2481
        %v2514 = vmul.f32 %v2220, %v2482
        %v2515 = vmul.f32 %v2222, %v2483
        %v2516 = vmul.f32 %v2224, %v2484
        %v2517 = vmul.f32 %v2226, %v2485
        %v2518 = vmul.f32 %v2228, %v2486
        %v2519 = vmul.f32 %v2230, %v2487
        %v2520 = vmul.f32 %v2232, %v2488
        %v2521 = vsel %vm1800, %v2489, 0.0
        %v2522 = vsel %vm1801, %v2490, 0.0
        %v2523 = vsel %vm1802, %v2491, 0.0
        %v2524 = vsel %vm1803, %v2492, 0.0
        %v2525 = vsel %vm1804, %v2493, 0.0
        %v2526 = vsel %vm1805, %v2494, 0.0
        %v2527 = vsel %vm1806, %v2495, 0.0
        %v2528 = vsel %vm1807, %v2496, 0.0
        %v2529 = vsel %vm1808, %v2497, 0.0
        %v2530 = vsel %vm1809, %v2498, 0.0
        %v2531 = vsel %vm1810, %v2499, 0.0
        %v2532 = vsel %vm1811, %v2500, 0.0
        %v2533 = vsel %vm1812, %v2501, 0.0
        %v2534 = vsel %vm1813, %v2502, 0.0
        %v2535 = vsel %vm1814, %v2503, 0.0
        %v2536 = vsel %vm1815, %v2504, 0.0
        %v2537 = vsel %vm1816, %v2505, 0.0
        %v2538 = vsel %vm1817, %v2506, 0.0
        %v2539 = vsel %vm1818, %v2507, 0.0
        %v2540 = vsel %vm1819, %v2508, 0.0
        %v2541 = vsel %vm1820, %v2509, 0.0
        %v2542 = vsel %vm1821, %v2510, 0.0
        %v2543 = vsel %vm1822, %v2511, 0.0
        %v2544 = vsel %vm1823, %v2512, 0.0
        %v2545 = vsel %vm1824, %v2513, 0.0
        %v2546 = vsel %vm1825, %v2514, 0.0
        %v2547 = vsel %vm1826, %v2515, 0.0
        %v2548 = vsel %vm1827, %v2516, 0.0
        %v2549 = vsel %vm1828, %v2517, 0.0
        %v2550 = vsel %vm1829, %v2518, 0.0
        %v2551 = vsel %vm1830, %v2519, 0.0
        %v2552 = vsel %vm1831, %v2520, 0.0
        %v2553 = vlaneseq
        %v2554 = vshrl.u32 %v2553, 7
        %v2555 = vsub.s32 0, %v2554
        %v2556 = vrot.slane %v376, %v2555
        %v2557 = vlaneseq
        %v2558 = vshrl.u32 %v2557, 7
        %v2559 = vsub.s32 1, %v2558
        %v2560 = vrot.slane %v376, %v2559
        %v2561 = vlaneseq
        %v2562 = vshrl.u32 %v2561, 7
        %v2563 = vsub.s32 2, %v2562
        %v2564 = vrot.slane %v376, %v2563
        %v2565 = vlaneseq
        %v2566 = vshrl.u32 %v2565, 7
        %v2567 = vsub.s32 3, %v2566
        %v2568 = vrot.slane %v376, %v2567
        %v2569 = vlaneseq
        %v2570 = vshrl.u32 %v2569, 7
        %v2571 = vsub.s32 4, %v2570
        %v2572 = vrot.slane %v376, %v2571
        %v2573 = vlaneseq
        %v2574 = vshrl.u32 %v2573, 7
        %v2575 = vsub.s32 5, %v2574
        %v2576 = vrot.slane %v376, %v2575
        %v2577 = vlaneseq
        %v2578 = vshrl.u32 %v2577, 7
        %v2579 = vsub.s32 6, %v2578
        %v2580 = vrot.slane %v376, %v2579
        %v2581 = vlaneseq
        %v2582 = vshrl.u32 %v2581, 7
        %v2583 = vsub.s32 7, %v2582
        %v2584 = vrot.slane %v376, %v2583
        %v2585 = vlaneseq
        %v2586 = vshrl.u32 %v2585, 7
        %v2587 = vsub.s32 0, %v2586
        %v2588 = vrot.slane %v377, %v2587
        %v2589 = vlaneseq
        %v2590 = vshrl.u32 %v2589, 7
        %v2591 = vsub.s32 1, %v2590
        %v2592 = vrot.slane %v377, %v2591
        %v2593 = vlaneseq
        %v2594 = vshrl.u32 %v2593, 7
        %v2595 = vsub.s32 2, %v2594
        %v2596 = vrot.slane %v377, %v2595
        %v2597 = vlaneseq
        %v2598 = vshrl.u32 %v2597, 7
        %v2599 = vsub.s32 3, %v2598
        %v2600 = vrot.slane %v377, %v2599
        %v2601 = vlaneseq
        %v2602 = vshrl.u32 %v2601, 7
        %v2603 = vsub.s32 4, %v2602
        %v2604 = vrot.slane %v377, %v2603
        %v2605 = vlaneseq
        %v2606 = vshrl.u32 %v2605, 7
        %v2607 = vsub.s32 5, %v2606
        %v2608 = vrot.slane %v377, %v2607
        %v2609 = vlaneseq
        %v2610 = vshrl.u32 %v2609, 7
        %v2611 = vsub.s32 6, %v2610
        %v2612 = vrot.slane %v377, %v2611
        %v2613 = vlaneseq
        %v2614 = vshrl.u32 %v2613, 7
        %v2615 = vsub.s32 7, %v2614
        %v2616 = vrot.slane %v377, %v2615
        %v2617 = vlaneseq
        %v2618 = vshrl.u32 %v2617, 7
        %v2619 = vsub.s32 0, %v2618
        %v2620 = vrot.slane %v378, %v2619
        %v2621 = vlaneseq
        %v2622 = vshrl.u32 %v2621, 7
        %v2623 = vsub.s32 1, %v2622
        %v2624 = vrot.slane %v378, %v2623
        %v2625 = vlaneseq
        %v2626 = vshrl.u32 %v2625, 7
        %v2627 = vsub.s32 2, %v2626
        %v2628 = vrot.slane %v378, %v2627
        %v2629 = vlaneseq
        %v2630 = vshrl.u32 %v2629, 7
        %v2631 = vsub.s32 3, %v2630
        %v2632 = vrot.slane %v378, %v2631
        %v2633 = vlaneseq
        %v2634 = vshrl.u32 %v2633, 7
        %v2635 = vsub.s32 4, %v2634
        %v2636 = vrot.slane %v378, %v2635
        %v2637 = vlaneseq
        %v2638 = vshrl.u32 %v2637, 7
        %v2639 = vsub.s32 5, %v2638
        %v2640 = vrot.slane %v378, %v2639
        %v2641 = vlaneseq
        %v2642 = vshrl.u32 %v2641, 7
        %v2643 = vsub.s32 6, %v2642
        %v2644 = vrot.slane %v378, %v2643
        %v2645 = vlaneseq
        %v2646 = vshrl.u32 %v2645, 7
        %v2647 = vsub.s32 7, %v2646
        %v2648 = vrot.slane %v378, %v2647
        %v2649 = vlaneseq
        %v2650 = vshrl.u32 %v2649, 7
        %v2651 = vsub.s32 0, %v2650
        %v2652 = vrot.slane %v379, %v2651
        %v2653 = vlaneseq
        %v2654 = vshrl.u32 %v2653, 7
        %v2655 = vsub.s32 1, %v2654
        %v2656 = vrot.slane %v379, %v2655
        %v2657 = vlaneseq
        %v2658 = vshrl.u32 %v2657, 7
        %v2659 = vsub.s32 2, %v2658
        %v2660 = vrot.slane %v379, %v2659
        %v2661 = vlaneseq
        %v2662 = vshrl.u32 %v2661, 7
        %v2663 = vsub.s32 3, %v2662
        %v2664 = vrot.slane %v379, %v2663
        %v2665 = vlaneseq
        %v2666 = vshrl.u32 %v2665, 7
        %v2667 = vsub.s32 4, %v2666
        %v2668 = vrot.slane %v379, %v2667
        %v2669 = vlaneseq
        %v2670 = vshrl.u32 %v2669, 7
        %v2671 = vsub.s32 5, %v2670
        %v2672 = vrot.slane %v379, %v2671
        %v2673 = vlaneseq
        %v2674 = vshrl.u32 %v2673, 7
        %v2675 = vsub.s32 6, %v2674
        %v2676 = vrot.slane %v379, %v2675
        %v2677 = vlaneseq
        %v2678 = vshrl.u32 %v2677, 7
        %v2679 = vsub.s32 7, %v2678
        %v2680 = vrot.slane %v379, %v2679
        %vm2681 = vcmp.eq.s32.totalorder %v381, %v2556
        %vm2682 = vcmp.eq.s32.totalorder %v381, %v2560
        %vm2683 = vcmp.eq.s32.totalorder %v381, %v2564
        %vm2684 = vcmp.eq.s32.totalorder %v381, %v2568
        %vm2685 = vcmp.eq.s32.totalorder %v381, %v2572
        %vm2686 = vcmp.eq.s32.totalorder %v381, %v2576
        %vm2687 = vcmp.eq.s32.totalorder %v381, %v2580
        %vm2688 = vcmp.eq.s32.totalorder %v381, %v2584
        %vm2689 = vcmp.eq.s32.totalorder %v381, %v2588
        %vm2690 = vcmp.eq.s32.totalorder %v381, %v2592
        %vm2691 = vcmp.eq.s32.totalorder %v381, %v2596
        %vm2692 = vcmp.eq.s32.totalorder %v381, %v2600
        %vm2693 = vcmp.eq.s32.totalorder %v381, %v2604
        %vm2694 = vcmp.eq.s32.totalorder %v381, %v2608
        %vm2695 = vcmp.eq.s32.totalorder %v381, %v2612
        %vm2696 = vcmp.eq.s32.totalorder %v381, %v2616
        %vm2697 = vcmp.eq.s32.totalorder %v381, %v2620
        %vm2698 = vcmp.eq.s32.totalorder %v381, %v2624
        %vm2699 = vcmp.eq.s32.totalorder %v381, %v2628
        %vm2700 = vcmp.eq.s32.totalorder %v381, %v2632
        %vm2701 = vcmp.eq.s32.totalorder %v381, %v2636
        %vm2702 = vcmp.eq.s32.totalorder %v381, %v2640
        %vm2703 = vcmp.eq.s32.totalorder %v381, %v2644
        %vm2704 = vcmp.eq.s32.totalorder %v381, %v2648
        %vm2705 = vcmp.eq.s32.totalorder %v381, %v2652
        %vm2706 = vcmp.eq.s32.totalorder %v381, %v2656
        %vm2707 = vcmp.eq.s32.totalorder %v381, %v2660
        %vm2708 = vcmp.eq.s32.totalorder %v381, %v2664
        %vm2709 = vcmp.eq.s32.totalorder %v381, %v2668
        %vm2710 = vcmp.eq.s32.totalorder %v381, %v2672
        %vm2711 = vcmp.eq.s32.totalorder %v381, %v2676
        %vm2712 = vcmp.eq.s32.totalorder %v381, %v2680
        %vm2713 = vmand %vm2681, %vm1800
        %vm2714 = vmand %vm2682, %vm1801
        %vm2715 = vmand %vm2683, %vm1802
        %vm2716 = vmand %vm2684, %vm1803
        %vm2717 = vmand %vm2685, %vm1804
        %vm2718 = vmand %vm2686, %vm1805
        %vm2719 = vmand %vm2687, %vm1806
        %vm2720 = vmand %vm2688, %vm1807
        %vm2721 = vmand %vm2689, %vm1808
        %vm2722 = vmand %vm2690, %vm1809
        %vm2723 = vmand %vm2691, %vm1810
        %vm2724 = vmand %vm2692, %vm1811
        %vm2725 = vmand %vm2693, %vm1812
        %vm2726 = vmand %vm2694, %vm1813
        %vm2727 = vmand %vm2695, %vm1814
        %vm2728 = vmand %vm2696, %vm1815
        %vm2729 = vmand %vm2697, %vm1816
        %vm2730 = vmand %vm2698, %vm1817
        %vm2731 = vmand %vm2699, %vm1818
        %vm2732 = vmand %vm2700, %vm1819
        %vm2733 = vmand %vm2701, %vm1820
        %vm2734 = vmand %vm2702, %vm1821
        %vm2735 = vmand %vm2703, %vm1822
        %vm2736 = vmand %vm2704, %vm1823
        %vm2737 = vmand %vm2705, %vm1824
        %vm2738 = vmand %vm2706, %vm1825
        %vm2739 = vmand %vm2707, %vm1826
        %vm2740 = vmand %vm2708, %vm1827
        %vm2741 = vmand %vm2709, %vm1828
        %vm2742 = vmand %vm2710, %vm1829
        %vm2743 = vmand %vm2711, %vm1830
        %vm2744 = vmand %vm2712, %vm1831
        %v2745 = vld [vmem:[%s336] sm:$0xf]
        %v2746 = vsel %vm2713, %v2521, 0.0
        %v2747 = vsel %vm2714, %v2522, 0.0
        %v2748 = vsel %vm2715, %v2523, 0.0
        %v2749 = vsel %vm2716, %v2524, 0.0
        %v2750 = vsel %vm2717, %v2525, 0.0
        %v2751 = vsel %vm2718, %v2526, 0.0
        %v2752 = vsel %vm2719, %v2527, 0.0
        %v2753 = vsel %vm2720, %v2528, 0.0
        %v2754 = vsel %vm2721, %v2529, 0.0
        %v2755 = vsel %vm2722, %v2530, 0.0
        %v2756 = vsel %vm2723, %v2531, 0.0
        %v2757 = vsel %vm2724, %v2532, 0.0
        %v2758 = vsel %vm2725, %v2533, 0.0
        %v2759 = vsel %vm2726, %v2534, 0.0
        %v2760 = vsel %vm2727, %v2535, 0.0
        %v2761 = vsel %vm2728, %v2536, 0.0
        %v2762 = vsel %vm2729, %v2537, 0.0
        %v2763 = vsel %vm2730, %v2538, 0.0
        %v2764 = vsel %vm2731, %v2539, 0.0
        %v2765 = vsel %vm2732, %v2540, 0.0
        %v2766 = vsel %vm2733, %v2541, 0.0
        %v2767 = vsel %vm2734, %v2542, 0.0
        %v2768 = vsel %vm2735, %v2543, 0.0
        %v2769 = vsel %vm2736, %v2544, 0.0
        %v2770 = vsel %vm2737, %v2545, 0.0
        %v2771 = vsel %vm2738, %v2546, 0.0
        %v2772 = vsel %vm2739, %v2547, 0.0
        %v2773 = vsel %vm2740, %v2548, 0.0
        %v2774 = vsel %vm2741, %v2549, 0.0
        %v2775 = vsel %vm2742, %v2550, 0.0
        %v2776 = vsel %vm2743, %v2551, 0.0
        %v2777 = vsel %vm2744, %v2552, 0.0
        %v2778 = vsel %vm1912, %v2746, 0.0
        %v2779 = vsel %vm1912, %v2747, 0.0
        %v2780 = vadd.f32 %v2778, %v2779
        %v2781 = vsel %vm1912, %v2748, 0.0
        %v2782 = vadd.f32 %v2780, %v2781
        %v2783 = vsel %vm1912, %v2749, 0.0
        %v2784 = vadd.f32 %v2782, %v2783
        %v2785 = vsel %vm1912, %v2750, 0.0
        %v2786 = vadd.f32 %v2784, %v2785
        %v2787 = vsel %vm1912, %v2751, 0.0
        %v2788 = vadd.f32 %v2786, %v2787
        %v2789 = vsel %vm1912, %v2752, 0.0
        %v2790 = vadd.f32 %v2788, %v2789
        %v2791 = vsel %vm1912, %v2753, 0.0
        %v2792 = vadd.f32 %v2790, %v2791
        %v2793 = vsel %vm1912, %v2754, 0.0
        %v2794 = vadd.f32 %v2792, %v2793
        %v2795 = vsel %vm1912, %v2755, 0.0
        %v2796 = vadd.f32 %v2794, %v2795
        %v2797 = vsel %vm1912, %v2756, 0.0
        %v2798 = vadd.f32 %v2796, %v2797
        %v2799 = vsel %vm1912, %v2757, 0.0
        %v2800 = vadd.f32 %v2798, %v2799
        %v2801 = vsel %vm1912, %v2758, 0.0
        %v2802 = vadd.f32 %v2800, %v2801
        %v2803 = vsel %vm1912, %v2759, 0.0
        %v2804 = vadd.f32 %v2802, %v2803
        %v2805 = vsel %vm1912, %v2760, 0.0
        %v2806 = vadd.f32 %v2804, %v2805
        %v2807 = vsel %vm1912, %v2761, 0.0
        %v2808 = vadd.f32 %v2806, %v2807
        %v2809 = vsel %vm1912, %v2762, 0.0
        %v2810 = vadd.f32 %v2808, %v2809
        %v2811 = vsel %vm1912, %v2763, 0.0
        %v2812 = vadd.f32 %v2810, %v2811
        %v2813 = vsel %vm1912, %v2764, 0.0
        %v2814 = vadd.f32 %v2812, %v2813
        %v2815 = vsel %vm1912, %v2765, 0.0
        %v2816 = vadd.f32 %v2814, %v2815
        %v2817 = vsel %vm1912, %v2766, 0.0
        %v2818 = vadd.f32 %v2816, %v2817
        %v2819 = vsel %vm1912, %v2767, 0.0
        %v2820 = vadd.f32 %v2818, %v2819
        %v2821 = vsel %vm1912, %v2768, 0.0
        %v2822 = vadd.f32 %v2820, %v2821
        %v2823 = vsel %vm1912, %v2769, 0.0
        %v2824 = vadd.f32 %v2822, %v2823
        %v2825 = vsel %vm1912, %v2770, 0.0
        %v2826 = vadd.f32 %v2824, %v2825
        %v2827 = vsel %vm1912, %v2771, 0.0
        %v2828 = vadd.f32 %v2826, %v2827
        %v2829 = vsel %vm1912, %v2772, 0.0
        %v2830 = vadd.f32 %v2828, %v2829
        %v2831 = vsel %vm1912, %v2773, 0.0
        %v2832 = vadd.f32 %v2830, %v2831
        %v2833 = vsel %vm1912, %v2774, 0.0
        %v2834 = vadd.f32 %v2832, %v2833
        %v2835 = vsel %vm1912, %v2775, 0.0
        %v2836 = vadd.f32 %v2834, %v2835
        %v2837 = vsel %vm1912, %v2776, 0.0
        %v2838 = vadd.f32 %v2836, %v2837
        %v2839 = vsel %vm1912, %v2777, 0.0
        %v2840 = vadd.f32 %v2838, %v2839
        %2841 = vadd.xlane.f32.xlu0 %v2840
        %v2842 = vpop.xlane.xlu0 %2841
        %v2843 = vadd.f32 %v2745, %v2842
        %vm2844 = vcmask 3072
        %2845 = vst.msk [vmem:[%s336] sm:$0xf] %vm2844, %v2843
        %v2846 = vld [vmem:[%s343] sm:$0xf]
        %v2847 = vmul.f32 %v2521, %v2521
        %v2848 = vmul.f32 %v2522, %v2522
        %v2849 = vmul.f32 %v2523, %v2523
        %v2850 = vmul.f32 %v2524, %v2524
        %v2851 = vmul.f32 %v2525, %v2525
        %v2852 = vmul.f32 %v2526, %v2526
        %v2853 = vmul.f32 %v2527, %v2527
        %v2854 = vmul.f32 %v2528, %v2528
        %v2855 = vmul.f32 %v2529, %v2529
        %v2856 = vmul.f32 %v2530, %v2530
        %v2857 = vmul.f32 %v2531, %v2531
        %v2858 = vmul.f32 %v2532, %v2532
        %v2859 = vmul.f32 %v2533, %v2533
        %v2860 = vmul.f32 %v2534, %v2534
        %v2861 = vmul.f32 %v2535, %v2535
        %v2862 = vmul.f32 %v2536, %v2536
        %v2863 = vmul.f32 %v2537, %v2537
        %v2864 = vmul.f32 %v2538, %v2538
        %v2865 = vmul.f32 %v2539, %v2539
        %v2866 = vmul.f32 %v2540, %v2540
        %v2867 = vmul.f32 %v2541, %v2541
        %v2868 = vmul.f32 %v2542, %v2542
        %v2869 = vmul.f32 %v2543, %v2543
        %v2870 = vmul.f32 %v2544, %v2544
        %v2871 = vmul.f32 %v2545, %v2545
        %v2872 = vmul.f32 %v2546, %v2546
        %v2873 = vmul.f32 %v2547, %v2547
        %v2874 = vmul.f32 %v2548, %v2548
        %v2875 = vmul.f32 %v2549, %v2549
        %v2876 = vmul.f32 %v2550, %v2550
        %v2877 = vmul.f32 %v2551, %v2551
        %v2878 = vmul.f32 %v2552, %v2552
        %v2879 = vsel %vm1912, %v2847, 0.0
        %v2880 = vsel %vm1912, %v2848, 0.0
        %v2881 = vadd.f32 %v2879, %v2880
        %v2882 = vsel %vm1912, %v2849, 0.0
        %v2883 = vadd.f32 %v2881, %v2882
        %v2884 = vsel %vm1912, %v2850, 0.0
        %v2885 = vadd.f32 %v2883, %v2884
        %v2886 = vsel %vm1912, %v2851, 0.0
        %v2887 = vadd.f32 %v2885, %v2886
        %v2888 = vsel %vm1912, %v2852, 0.0
        %v2889 = vadd.f32 %v2887, %v2888
        %v2890 = vsel %vm1912, %v2853, 0.0
        %v2891 = vadd.f32 %v2889, %v2890
        %v2892 = vsel %vm1912, %v2854, 0.0
        %v2893 = vadd.f32 %v2891, %v2892
        %v2894 = vsel %vm1912, %v2855, 0.0
        %v2895 = vadd.f32 %v2893, %v2894
        %v2896 = vsel %vm1912, %v2856, 0.0
        %v2897 = vadd.f32 %v2895, %v2896
        %v2898 = vsel %vm1912, %v2857, 0.0
        %v2899 = vadd.f32 %v2897, %v2898
        %v2900 = vsel %vm1912, %v2858, 0.0
        %v2901 = vadd.f32 %v2899, %v2900
        %v2902 = vsel %vm1912, %v2859, 0.0
        %v2903 = vadd.f32 %v2901, %v2902
        %v2904 = vsel %vm1912, %v2860, 0.0
        %v2905 = vadd.f32 %v2903, %v2904
        %v2906 = vsel %vm1912, %v2861, 0.0
        %v2907 = vadd.f32 %v2905, %v2906
        %v2908 = vsel %vm1912, %v2862, 0.0
        %v2909 = vadd.f32 %v2907, %v2908
        %v2910 = vsel %vm1912, %v2863, 0.0
        %v2911 = vadd.f32 %v2909, %v2910
        %v2912 = vsel %vm1912, %v2864, 0.0
        %v2913 = vadd.f32 %v2911, %v2912
        %v2914 = vsel %vm1912, %v2865, 0.0
        %v2915 = vadd.f32 %v2913, %v2914
        %v2916 = vsel %vm1912, %v2866, 0.0
        %v2917 = vadd.f32 %v2915, %v2916
        %v2918 = vsel %vm1912, %v2867, 0.0
        %v2919 = vadd.f32 %v2917, %v2918
        %v2920 = vsel %vm1912, %v2868, 0.0
        %v2921 = vadd.f32 %v2919, %v2920
        %v2922 = vsel %vm1912, %v2869, 0.0
        %v2923 = vadd.f32 %v2921, %v2922
        %v2924 = vsel %vm1912, %v2870, 0.0
        %v2925 = vadd.f32 %v2923, %v2924
        %v2926 = vsel %vm1912, %v2871, 0.0
        %v2927 = vadd.f32 %v2925, %v2926
        %v2928 = vsel %vm1912, %v2872, 0.0
        %v2929 = vadd.f32 %v2927, %v2928
        %v2930 = vsel %vm1912, %v2873, 0.0
        %v2931 = vadd.f32 %v2929, %v2930
        %v2932 = vsel %vm1912, %v2874, 0.0
        %v2933 = vadd.f32 %v2931, %v2932
        %v2934 = vsel %vm1912, %v2875, 0.0
        %v2935 = vadd.f32 %v2933, %v2934
        %v2936 = vsel %vm1912, %v2876, 0.0
        %v2937 = vadd.f32 %v2935, %v2936
        %v2938 = vsel %vm1912, %v2877, 0.0
        %v2939 = vadd.f32 %v2937, %v2938
        %v2940 = vsel %vm1912, %v2878, 0.0
        %v2941 = vadd.f32 %v2939, %v2940
        %2942 = vadd.xlane.f32.xlu0 %v2941
        %v2943 = vpop.xlane.xlu0 %2942
        %v2944 = vadd.f32 %v2846, %v2943
        %2945 = vst.msk [vmem:[%s343] sm:$0xf] %vm2844, %v2944
        %v2946 = vld [vmem:[%s350] sm:$0xf]
        %v2947 = vsel %vm2713, 1.0, 0.0
        %v2948 = vsel %vm2714, 1.0, 0.0
        %v2949 = vsel %vm2715, 1.0, 0.0
        %v2950 = vsel %vm2716, 1.0, 0.0
        %v2951 = vsel %vm2717, 1.0, 0.0
        %v2952 = vsel %vm2718, 1.0, 0.0
        %v2953 = vsel %vm2719, 1.0, 0.0
        %v2954 = vsel %vm2720, 1.0, 0.0
        %v2955 = vsel %vm2721, 1.0, 0.0
        %v2956 = vsel %vm2722, 1.0, 0.0
        %v2957 = vsel %vm2723, 1.0, 0.0
        %v2958 = vsel %vm2724, 1.0, 0.0
        %v2959 = vsel %vm2725, 1.0, 0.0
        %v2960 = vsel %vm2726, 1.0, 0.0
        %v2961 = vsel %vm2727, 1.0, 0.0
        %v2962 = vsel %vm2728, 1.0, 0.0
        %v2963 = vsel %vm2729, 1.0, 0.0
        %v2964 = vsel %vm2730, 1.0, 0.0
        %v2965 = vsel %vm2731, 1.0, 0.0
        %v2966 = vsel %vm2732, 1.0, 0.0
        %v2967 = vsel %vm2733, 1.0, 0.0
        %v2968 = vsel %vm2734, 1.0, 0.0
        %v2969 = vsel %vm2735, 1.0, 0.0
        %v2970 = vsel %vm2736, 1.0, 0.0
        %v2971 = vsel %vm2737, 1.0, 0.0
        %v2972 = vsel %vm2738, 1.0, 0.0
        %v2973 = vsel %vm2739, 1.0, 0.0
        %v2974 = vsel %vm2740, 1.0, 0.0
        %v2975 = vsel %vm2741, 1.0, 0.0
        %v2976 = vsel %vm2742, 1.0, 0.0
        %v2977 = vsel %vm2743, 1.0, 0.0
        %v2978 = vsel %vm2744, 1.0, 0.0
        %v2979 = vsel %vm1912, %v2947, 0.0
        %v2980 = vsel %vm1912, %v2948, 0.0
        %v2981 = vadd.f32 %v2979, %v2980
        %v2982 = vsel %vm1912, %v2949, 0.0
        %v2983 = vadd.f32 %v2981, %v2982
        %v2984 = vsel %vm1912, %v2950, 0.0
        %v2985 = vadd.f32 %v2983, %v2984
        %v2986 = vsel %vm1912, %v2951, 0.0
        %v2987 = vadd.f32 %v2985, %v2986
        %v2988 = vsel %vm1912, %v2952, 0.0
        %v2989 = vadd.f32 %v2987, %v2988
        %v2990 = vsel %vm1912, %v2953, 0.0
        %v2991 = vadd.f32 %v2989, %v2990
        %v2992 = vsel %vm1912, %v2954, 0.0
        %v2993 = vadd.f32 %v2991, %v2992
        %v2994 = vsel %vm1912, %v2955, 0.0
        %v2995 = vadd.f32 %v2993, %v2994
        %v2996 = vsel %vm1912, %v2956, 0.0
        %v2997 = vadd.f32 %v2995, %v2996
        %v2998 = vsel %vm1912, %v2957, 0.0
        %v2999 = vadd.f32 %v2997, %v2998
        %v3000 = vsel %vm1912, %v2958, 0.0
        %v3001 = vadd.f32 %v2999, %v3000
        %v3002 = vsel %vm1912, %v2959, 0.0
        %v3003 = vadd.f32 %v3001, %v3002
        %v3004 = vsel %vm1912, %v2960, 0.0
        %v3005 = vadd.f32 %v3003, %v3004
        %v3006 = vsel %vm1912, %v2961, 0.0
        %v3007 = vadd.f32 %v3005, %v3006
        %v3008 = vsel %vm1912, %v2962, 0.0
        %v3009 = vadd.f32 %v3007, %v3008
        %v3010 = vsel %vm1912, %v2963, 0.0
        %v3011 = vadd.f32 %v3009, %v3010
        %v3012 = vsel %vm1912, %v2964, 0.0
        %v3013 = vadd.f32 %v3011, %v3012
        %v3014 = vsel %vm1912, %v2965, 0.0
        %v3015 = vadd.f32 %v3013, %v3014
        %v3016 = vsel %vm1912, %v2966, 0.0
        %v3017 = vadd.f32 %v3015, %v3016
        %v3018 = vsel %vm1912, %v2967, 0.0
        %v3019 = vadd.f32 %v3017, %v3018
        %v3020 = vsel %vm1912, %v2968, 0.0
        %v3021 = vadd.f32 %v3019, %v3020
        %v3022 = vsel %vm1912, %v2969, 0.0
        %v3023 = vadd.f32 %v3021, %v3022
        %v3024 = vsel %vm1912, %v2970, 0.0
        %v3025 = vadd.f32 %v3023, %v3024
        %v3026 = vsel %vm1912, %v2971, 0.0
        %v3027 = vadd.f32 %v3025, %v3026
        %v3028 = vsel %vm1912, %v2972, 0.0
        %v3029 = vadd.f32 %v3027, %v3028
        %v3030 = vsel %vm1912, %v2973, 0.0
        %v3031 = vadd.f32 %v3029, %v3030
        %v3032 = vsel %vm1912, %v2974, 0.0
        %v3033 = vadd.f32 %v3031, %v3032
        %v3034 = vsel %vm1912, %v2975, 0.0
        %v3035 = vadd.f32 %v3033, %v3034
        %v3036 = vsel %vm1912, %v2976, 0.0
        %v3037 = vadd.f32 %v3035, %v3036
        %v3038 = vsel %vm1912, %v2977, 0.0
        %v3039 = vadd.f32 %v3037, %v3038
        %v3040 = vsel %vm1912, %v2978, 0.0
        %v3041 = vadd.f32 %v3039, %v3040
        %3042 = vadd.xlane.f32.xlu0 %v3041
        %v3043 = vpop.xlane.xlu0 %3042
        %v3044 = vadd.f32 %v2946, %v3043
        %3045 = vst.msk [vmem:[%s350] sm:$0xf] %vm2844, %v3044
      $region40: #{dice_loss.1} parent=27 // pred_fallthru
        _
      %p3046 = scmp.lt.s32.totalorder %s21, 1
      %s3047 = scalar_select %p3046, %s21, 1
      %p3048 = scmp.lt.s32.totalorder %s22, 0
      %s3049 = scalar_select %p3048, %s22, 0
      %s3050 = sadd.s32 %s3049, %s3047
      %s3051 = smul.addr %s3050, 4
      %s3052 = scalar_lea.vmem %s2, %s3051
      %p3053 = scmp.lt.s32.totalorder %s21, 1
      %s3054 = scalar_select %p3053, %s21, 1
      %p3055 = scmp.lt.s32.totalorder %s22, 0
      %s3056 = scalar_select %p3055, %s22, 0
      %s3057 = sadd.s32 %s3056, %s3054
      %s3058 = smul.addr %s3057, 4
      %s3059 = scalar_lea.vmem %s3, %s3058
      %p3060 = scmp.lt.s32.totalorder %s21, 1
      %s3061 = scalar_select %p3060, %s21, 1
      %p3062 = scmp.lt.s32.totalorder %s22, 0
      %s3063 = scalar_select %p3062, %s22, 0
      %s3064 = sadd.s32 %s3063, %s3061
      %s3065 = smul.addr %s3064, 4
      %s3066 = scalar_lea.vmem %s4, %s3065
      // Predicated region
      $region41: #{dice_loss.1} parent=27 // pred_check
        %p3067 = pneg %p123
      $region42: #{dice_loss.1} parent=27 // pred_check_branch
        %3069 = sbr.rel (%p3067) target = $region44
      $region43: #{dice_loss.1} parent=27 // pred_region
        _
      $region44: #{dice_loss.1} parent=27 // pred_fallthru
        _
      // Predicated region
      $region45: #{dice_loss.1} parent=27 // pred_check
        %p3070 = pneg %p151
      $region46: #{dice_loss.1} parent=27 // pred_check_branch
        %3072 = sbr.rel (%p3070) target = $region48
      $region47: #{dice_loss.1} parent=27 // pred_region
        _
      $region48: #{dice_loss.1} parent=27 // pred_fallthru
        _
      // Predicated region
      $region49: #{dice_loss.1} parent=27 // pred_check
        %p3073 = pneg %p179
      $region50: #{dice_loss.1} parent=27 // pred_check_branch
        %3075 = sbr.rel (%p3073) target = $region52
      $region51: #{dice_loss.1} parent=27 // pred_region
        _
      $region52: #{dice_loss.1} parent=27 // pred_fallthru
        _
    $region28: #{dice_loss.1} parent=5 // pred_fallthru
      _
    %p3076 = scmp.le.s32.totalorder 2, %s11
    // Predicated region
    $region53: #{dice_loss.1} parent=5 // pred_check
      %p3077 = pneg %p3076
    $region54: #{dice_loss.1} parent=5 // pred_check_branch
      %3079 = sbr.rel (%p3077) target = $region56
    $region55: #{dice_loss.1} parent=5 // pred_region
      %s3080 = ssub.s32 %s11, 2
      // Predicated region
      $region57: #{dice_loss.1} parent=55 // pred_check
        %p3081 = pneg %p129
      $region58: #{dice_loss.1} parent=55 // pred_check_branch
        %3083 = sbr.rel (%p3081) target = $region60
      $region59: #{dice_loss.1} parent=55 // pred_region
        %p3084 = scmp.lt.s32.totalorder %s24, 1
        %s3085 = scalar_select %p3084, %s24, 1
        %p3086 = scmp.lt.s32.totalorder %s25, 0
        %s3087 = scalar_select %p3086, %s25, 0
        %s3088 = sadd.s32 %s3087, %s3085
        %s3089 = smul.addr %s3088, 4
        %s3090 = scalar_lea.vmem %s2, %s3089
      $region60: #{dice_loss.1} parent=55 // pred_fallthru
        _
      // Predicated region
      $region61: #{dice_loss.1} parent=55 // pred_check
        %p3091 = pneg %p157
      $region62: #{dice_loss.1} parent=55 // pred_check_branch
        %3093 = sbr.rel (%p3091) target = $region64
      $region63: #{dice_loss.1} parent=55 // pred_region
        %p3094 = scmp.lt.s32.totalorder %s24, 1
        %s3095 = scalar_select %p3094, %s24, 1
        %p3096 = scmp.lt.s32.totalorder %s25, 0
        %s3097 = scalar_select %p3096, %s25, 0
        %s3098 = sadd.s32 %s3097, %s3095
        %s3099 = smul.addr %s3098, 4
        %s3100 = scalar_lea.vmem %s3, %s3099
      $region64: #{dice_loss.1} parent=55 // pred_fallthru
        _
      // Predicated region
      $region65: #{dice_loss.1} parent=55 // pred_check
        %p3101 = pneg %p185
      $region66: #{dice_loss.1} parent=55 // pred_check_branch
        %3103 = sbr.rel (%p3101) target = $region68
      $region67: #{dice_loss.1} parent=55 // pred_region
        %p3104 = scmp.lt.s32.totalorder %s24, 1
        %s3105 = scalar_select %p3104, %s24, 1
        %p3106 = scmp.lt.s32.totalorder %s25, 0
        %s3107 = scalar_select %p3106, %s25, 0
        %s3108 = sadd.s32 %s3107, %s3105
        %s3109 = smul.addr %s3108, 4
        %s3110 = scalar_lea.vmem %s4, %s3109
      $region68: #{dice_loss.1} parent=55 // pred_fallthru
        _
    $region56: #{dice_loss.1} parent=5 // pred_fallthru
      _
  $region6: #{dice_loss.1} parent=0 // loop_footer
    %s15 = sadd.s32 1, %s11
  $region7: #{dice_loss.1} parent=0 // loop_footer_branch
    %10 = sbr.rel target = $region3
  $region8: #{dice_loss.1} parent=0 // loop_exit
    _

</llo_original>
